<compile_context>
chip_gen: v7x
topology: tpu7x:2x2x1
jax: 0.10.0
libtpu: 0.0.40
codegen_flags: <defaults>
</compile_context>

<pallas_src>
import functools

import jax
import jax.numpy as jnp
from jax.experimental import pallas as pl
from jax.experimental.pallas import tpu as pltpu


def _round_up(n, m):
    return ((n + m - 1) // m) * m


def _coupling_kernel(x_ref, mask_ref, w1_ref, b1_ref, w2_ref, b2_ref,
                     w3_ref, b3_ref, out_ref, logdet_ref, *,
                     reverse: bool, input_dim: int):
    x = x_ref[...].astype(jnp.float32)          # (tile, D)
    mask = mask_ref[...]                        # (1, D) f32 -> broadcasts over batch
    one_minus = 1.0 - mask
    x0 = x * mask

    # --- net: Linear -> LeakyReLU -> Linear -> LeakyReLU -> Linear (fused s|t) ---
    # MXU inputs in the weights' dtype (bf16 by default, f32 if requested);
    # accumulation and all elementwise math stay in f32 (v5e-safe).
    wdt = w1_ref.dtype
    h = jnp.dot(x0.astype(wdt), w1_ref[...],
                preferred_element_type=jnp.float32) + b1_ref[...]
    h = jnp.where(h > 0, h, 0.01 * h)           # LeakyReLU (torch default slope 0.01)
    h = jnp.dot(h.astype(wdt), w2_ref[...],
                preferred_element_type=jnp.float32) + b2_ref[...]
    h = jnp.where(h > 0, h, 0.01 * h)
    # single (tile, H) @ (H, 2D) matmul; split at column D (torch.chunk: s first)
    st = jnp.dot(h.astype(wdt), w3_ref[...],
                 preferred_element_type=jnp.float32) + b3_ref[...]
    s = one_minus * jnp.tanh(st[:, :input_dim])
    t = one_minus * st[:, input_dim:]

    if reverse:
        tmp = (x - t) * jnp.exp(-s)
        ld = -jnp.sum(s, axis=-1, keepdims=True)
    else:
        tmp = x * jnp.exp(s) + t
        ld = jnp.sum(s, axis=-1, keepdims=True)

    out_ref[...] = (x0 + one_minus * tmp).astype(out_ref.dtype)
    logdet_ref[...] = ld.astype(logdet_ref.dtype)


def prepare_params(params, mask, weight_dtype=jnp.bfloat16):
    """One-time weight prep, hoisted out of the per-call path.

    Casts weights to the MXU input dtype and reshapes biases / mask to (1, N).
    Use weight_dtype=jnp.float32 if bf16 log-det error matters (deep flows).
    """
    return {
        "mask": jnp.asarray(mask, jnp.float32).reshape(1, -1),
        "w1": jnp.asarray(params["w1"]).astype(weight_dtype),
        "b1": jnp.asarray(params["b1"], jnp.float32).reshape(1, -1),
        "w2": jnp.asarray(params["w2"]).astype(weight_dtype),
        "b2": jnp.asarray(params["b2"], jnp.float32).reshape(1, -1),
        "w3": jnp.asarray(params["w3"]).astype(weight_dtype),  # (H, 2*D), s|t fused
        "b3": jnp.asarray(params["b3"], jnp.float32).reshape(1, -1),
    }


@functools.partial(jax.jit,
                   static_argnames=("reverse", "batch_tile", "vmem_limit_bytes"))
def affine_coupling_forward(x, prepared, *, reverse=False, batch_tile=512,
                            vmem_limit_bytes=48 << 20):
    """x: (B, D). prepared: output of prepare_params. Returns (out (B,D), log_det (B,))."""
    B, D = x.shape
    H = prepared["w1"].shape[1]
    assert prepared["w3"].shape == (H, 2 * D)

    # Large batch tiles amortize the ~0.35us/step pipeline overhead, but cap the
    # tile so the "parallel" batch axis has >= 2 steps whenever B > 8 so both
    # TensorCores are used on v7x (negligible cost on single-TC v5e/v6e).
    tile = min(batch_tile, _round_up(B, 8))
    if B > 8:
        tile = min(tile, _round_up(-(-B // 2), 8))
    tile = max(tile, 8)
    Bp = _round_up(B, tile)
    xp = x if Bp == B else jnp.pad(x, ((0, Bp - B), (0, 0)))

    kernel = functools.partial(_coupling_kernel, reverse=reverse, input_dim=D)
    const = lambda i: (0, 0)
    row = lambda i: (i, 0)

    # TODO(synk): single-buffer the constant-index operands (mask/weights/biases)
    # with pipeline_mode=pl.Buffered(1) and add a K-tiled "arbitrary" reduction
    # axis for w2 before scaling H into the thousands (v7x has only 64 MiB VMEM).
    out, logdet = pl.pallas_call(
        kernel,
        out_shape=(
            jax.ShapeDtypeStruct((Bp, D), x.dtype),
            jax.ShapeDtypeStruct((Bp, 1), jnp.float32),
        ),
        grid_spec=pltpu.PrefetchScalarGridSpec(
            num_scalar_prefetch=0,
            grid=(Bp // tile,),
            in_specs=[
                pl.BlockSpec((tile, D), row),      # x
                pl.BlockSpec((1, D), const),       # mask
                pl.BlockSpec((D, H), const),       # w1
                pl.BlockSpec((1, H), const),       # b1
                pl.BlockSpec((H, H), const),       # w2
                pl.BlockSpec((1, H), const),       # b2
                pl.BlockSpec((H, 2 * D), const),   # w3 (s|t fused)
                pl.BlockSpec((1, 2 * D), const),   # b3
            ],
            out_specs=[
                pl.BlockSpec((tile, D), row),      # output
                pl.BlockSpec((tile, 1), row),      # log-det column
            ],
        ),
        compiler_params=pltpu.CompilerParams(
            dimension_semantics=("parallel",),
            vmem_limit_bytes=vmem_limit_bytes),
    )(xp, prepared["mask"], prepared["w1"], prepared["b1"],
      prepared["w2"], prepared["b2"], prepared["w3"], prepared["b3"])

    return out[:B], logdet[:B, 0]


def _reference(x, mask, params, reverse=False):
    """Pure-JAX f32 reference mirroring the PyTorch module."""
    x0 = x * mask
    h = jnp.dot(x0, params["w1"]) + params["b1"]
    h = jnp.where(h > 0, h, 0.01 * h)
    h = jnp.dot(h, params["w2"]) + params["b2"]
    h = jnp.where(h > 0, h, 0.01 * h)
    st = jnp.dot(h, params["w3"]) + params["b3"]
    D = x.shape[1]
    s, t = st[:, :D], st[:, D:]
    s = (1 - mask) * jnp.tanh(s)
    t = (1 - mask) * t
    if reverse:
        tmp = (x - t) * jnp.exp(-s)
        out = x0 + (1 - mask) * tmp
        log_det = -s.sum(-1)
    else:
        tmp = x * jnp.exp(s) + t
        out = x0 + (1 - mask) * tmp
        log_det = s.sum(-1)
    return out, log_det


def init_params(key, input_dim, hidden_dim):
    """Deterministic init (uniform, roughly matching nn.Linear's scale)."""
    ks = jax.random.split(key, 6)

    def lin(kw, kb, fan_in, fan_out):
        bound = 1.0 / jnp.sqrt(fan_in)
        w = jax.random.uniform(kw, (fan_in, fan_out), jnp.float32, -bound, bound)
        b = jax.random.uniform(kb, (fan_out,), jnp.float32, -bound, bound)
        return w, b

    w1, b1 = lin(ks[0], ks[1], input_dim, hidden_dim)
    w2, b2 = lin(ks[2], ks[3], hidden_dim, hidden_dim)
    w3, b3 = lin(ks[4], ks[5], hidden_dim, 2 * input_dim)
    return {"w1": w1, "b1": b1, "w2": w2, "b2": b2, "w3": w3, "b3": b3}


if __name__ == "__main__":
    key = jax.random.PRNGKey(0)
    k_x, k_p, k_x2 = jax.random.split(key, 3)

    D, H = 16, 32
    mask = (jnp.arange(D) % 2).astype(jnp.float32)   # checkerboard coupling mask
    params = init_params(k_p, D, H)
    prepared = prepare_params(params, mask)          # one-time weight prep (bf16 MXU)

    # main test: batch large enough for 2 grid steps (256-row tiles)
    B = 512
    x = jax.random.normal(k_x, (B, D), jnp.float32)

    out, log_det = affine_coupling_forward(x, prepared, reverse=False)
    out = jax.block_until_ready(out)
    log_det = jax.block_until_ready(log_det)

    ref_out, ref_ld = _reference(x, mask, params, reverse=False)
    assert out.shape == (B, D) and log_det.shape == (B,)
    # bf16 MXU inputs -> compare against the f32 reference with moderate tolerance
    assert jnp.allclose(out, ref_out, atol=5e-2, rtol=5e-2)
    assert jnp.allclose(log_det, ref_ld, atol=1e-1, rtol=1e-1)

    # reverse (inverse) path round-trips tightly (same s, t recomputed from x0)
    inv, inv_ld = affine_coupling_forward(out, prepared, reverse=True)
    inv = jax.block_until_ready(inv)
    assert jnp.allclose(inv, x, atol=1e-4, rtol=1e-4)
    assert jnp.allclose(inv_ld, -log_det, atol=1e-5, rtol=1e-5)

    # non-tile-multiple batch: exercises the batch padding / remainder path
    B2 = 40
    x2 = jax.random.normal(k_x2, (B2, D), jnp.float32)
    out2, ld2 = affine_coupling_forward(x2, prepared, reverse=False)
    out2 = jax.block_until_ready(out2)
    ref_out2, ref_ld2 = _reference(x2, mask, params, reverse=False)
    assert out2.shape == (B2, D) and ld2.shape == (B2,)
    assert jnp.allclose(out2, ref_out2, atol=5e-2, rtol=5e-2)
    assert jnp.allclose(ld2, ref_ld2, atol=1e-1, rtol=1e-1)

    # f32-weight path (correctness-concern flag) matches the reference tightly
    prepared_f32 = prepare_params(params, mask, weight_dtype=jnp.float32)
    out3, ld3 = affine_coupling_forward(x2, prepared_f32, reverse=False)
    out3 = jax.block_until_ready(out3)
    assert jnp.allclose(out3, ref_out2, atol=1e-4, rtol=1e-4)
    assert jnp.allclose(ld3, ref_ld2, atol=1e-4, rtol=1e-4)

    print("KERNEL_OK")
</pallas_src>

<mosaic_0001>
module attributes {stable_mosaic.version = 11 : i64} {
  func.func @_coupling_kernel(%arg0: i32, %arg1: memref<256x16xf32, #tpu.memory_space<vmem>>, %arg2: memref<1x16xf32, #tpu.memory_space<vmem>>, %arg3: memref<16x32xbf16, #tpu.memory_space<vmem>>, %arg4: memref<1x32xf32, #tpu.memory_space<vmem>>, %arg5: memref<32x32xbf16, #tpu.memory_space<vmem>>, %arg6: memref<1x32xf32, #tpu.memory_space<vmem>>, %arg7: memref<32x32xbf16, #tpu.memory_space<vmem>>, %arg8: memref<1x32xf32, #tpu.memory_space<vmem>>, %arg9: memref<256x16xf32, #tpu.memory_space<vmem>>, %arg10: memref<256x1xf32, #tpu.memory_space<vmem>>) attributes {dimension_semantics = [#tpu.dimension_semantics<parallel>], iteration_bounds = array<i64: 2>, scalar_prefetch = 0 : i64, scratch_operands = 0 : i64, tpu.core_type = #tpu.core_type<tc>, window_params = [{transform_indices = @transform_0, window_bounds = array<i64: 256, 16>}, {pipeline_mode = #tpu.pipeline_mode<synchronous>, transform_indices = @transform_1, window_bounds = array<i64: 1, 16>}, {pipeline_mode = #tpu.pipeline_mode<synchronous>, transform_indices = @transform_2, window_bounds = array<i64: 16, 32>}, {pipeline_mode = #tpu.pipeline_mode<synchronous>, transform_indices = @transform_3, window_bounds = array<i64: 1, 32>}, {pipeline_mode = #tpu.pipeline_mode<synchronous>, transform_indices = @transform_4, window_bounds = array<i64: 32, 32>}, {pipeline_mode = #tpu.pipeline_mode<synchronous>, transform_indices = @transform_5, window_bounds = array<i64: 1, 32>}, {pipeline_mode = #tpu.pipeline_mode<synchronous>, transform_indices = @transform_6, window_bounds = array<i64: 32, 32>}, {pipeline_mode = #tpu.pipeline_mode<synchronous>, transform_indices = @transform_7, window_bounds = array<i64: 1, 32>}, {transform_indices = @transform_8, window_bounds = array<i64: 256, 16>}, {transform_indices = @transform_9, window_bounds = array<i64: 256, 1>}]} {
    %c0 = arith.constant 0 : index
    %c0_0 = arith.constant 0 : index
    %0 = vector.load %arg1[%c0, %c0_0] : memref<256x16xf32, #tpu.memory_space<vmem>>, vector<256x16xf32>
    %c0_1 = arith.constant 0 : index
    %c0_2 = arith.constant 0 : index
    %1 = vector.load %arg2[%c0_1, %c0_2] : memref<1x16xf32, #tpu.memory_space<vmem>>, vector<1x16xf32>
    %cst = arith.constant 1.000000e+00 : f32
    %2 = vector.broadcast %cst : f32 to vector<1x16xf32>
    %3 = arith.subf %2, %1 : vector<1x16xf32>
    %4 = vector.broadcast %1 : vector<1x16xf32> to vector<256x16xf32>
    %5 = arith.mulf %0, %4 : vector<256x16xf32>
    %6 = arith.truncf %5 : vector<256x16xf32> to vector<256x16xbf16>
    %c0_3 = arith.constant 0 : index
    %c0_4 = arith.constant 0 : index
    %7 = vector.load %arg3[%c0_3, %c0_4] : memref<16x32xbf16, #tpu.memory_space<vmem>>, vector<16x32xbf16>
    %cst_5 = arith.constant dense<0.000000e+00> : vector<256x32xf32>
    %8 = tpu.matmul %6, %7, %cst_5 {dimension_numbers = #tpu.dot_dimension_numbers<[1], [0], [0], [1], [0, 0, 1, 1], [], []>} : vector<256x16xbf16>, vector<16x32xbf16>, vector<256x32xf32> -> vector<256x32xf32>
    %c0_6 = arith.constant 0 : index
    %c0_7 = arith.constant 0 : index
    %9 = vector.load %arg4[%c0_6, %c0_7] : memref<1x32xf32, #tpu.memory_space<vmem>>, vector<1x32xf32>
    %10 = vector.broadcast %9 : vector<1x32xf32> to vector<256x32xf32>
    %11 = arith.addf %8, %10 : vector<256x32xf32>
    %cst_8 = arith.constant 0.000000e+00 : f32
    %12 = vector.broadcast %cst_8 : f32 to vector<256x32xf32>
    %13 = arith.cmpf ogt, %11, %12 : vector<256x32xf32>
    %cst_9 = arith.constant 0.00999999977 : f32
    %14 = vector.broadcast %cst_9 : f32 to vector<256x32xf32>
    %15 = arith.mulf %14, %11 : vector<256x32xf32>
    %16 = arith.select %13, %11, %15 : vector<256x32xi1>, vector<256x32xf32>
    %17 = arith.truncf %16 : vector<256x32xf32> to vector<256x32xbf16>
    %c0_10 = arith.constant 0 : index
    %c0_11 = arith.constant 0 : index
    %18 = vector.load %arg5[%c0_10, %c0_11] : memref<32x32xbf16, #tpu.memory_space<vmem>>, vector<32x32xbf16>
    %cst_12 = arith.constant dense<0.000000e+00> : vector<256x32xf32>
    %19 = tpu.matmul %17, %18, %cst_12 {dimension_numbers = #tpu.dot_dimension_numbers<[1], [0], [0], [1], [0, 0, 1, 1], [], []>} : vector<256x32xbf16>, vector<32x32xbf16>, vector<256x32xf32> -> vector<256x32xf32>
    %c0_13 = arith.constant 0 : index
    %c0_14 = arith.constant 0 : index
    %20 = vector.load %arg6[%c0_13, %c0_14] : memref<1x32xf32, #tpu.memory_space<vmem>>, vector<1x32xf32>
    %21 = vector.broadcast %20 : vector<1x32xf32> to vector<256x32xf32>
    %22 = arith.addf %19, %21 : vector<256x32xf32>
    %cst_15 = arith.constant 0.000000e+00 : f32
    %23 = vector.broadcast %cst_15 : f32 to vector<256x32xf32>
    %24 = arith.cmpf ogt, %22, %23 : vector<256x32xf32>
    %cst_16 = arith.constant 0.00999999977 : f32
    %25 = vector.broadcast %cst_16 : f32 to vector<256x32xf32>
    %26 = arith.mulf %25, %22 : vector<256x32xf32>
    %27 = arith.select %24, %22, %26 : vector<256x32xi1>, vector<256x32xf32>
    %28 = arith.truncf %27 : vector<256x32xf32> to vector<256x32xbf16>
    %c0_17 = arith.constant 0 : index
    %c0_18 = arith.constant 0 : index
    %29 = vector.load %arg7[%c0_17, %c0_18] : memref<32x32xbf16, #tpu.memory_space<vmem>>, vector<32x32xbf16>
    %cst_19 = arith.constant dense<0.000000e+00> : vector<256x32xf32>
    %30 = tpu.matmul %28, %29, %cst_19 {dimension_numbers = #tpu.dot_dimension_numbers<[1], [0], [0], [1], [0, 0, 1, 1], [], []>} : vector<256x32xbf16>, vector<32x32xbf16>, vector<256x32xf32> -> vector<256x32xf32>
    %c0_20 = arith.constant 0 : index
    %c0_21 = arith.constant 0 : index
    %31 = vector.load %arg8[%c0_20, %c0_21] : memref<1x32xf32, #tpu.memory_space<vmem>>, vector<1x32xf32>
    %32 = vector.broadcast %31 : vector<1x32xf32> to vector<256x32xf32>
    %33 = arith.addf %30, %32 : vector<256x32xf32>
    %34 = vector.extract_strided_slice %33 {offsets = [0, 0], sizes = [256, 16], strides = [1, 1]} : vector<256x32xf32> to vector<256x16xf32>
    %35 = math.tanh %34 : vector<256x16xf32>
    %36 = vector.broadcast %3 : vector<1x16xf32> to vector<256x16xf32>
    %37 = arith.mulf %36, %35 : vector<256x16xf32>
    %38 = vector.extract_strided_slice %33 {offsets = [0, 16], sizes = [256, 16], strides = [1, 1]} : vector<256x32xf32> to vector<256x16xf32>
    %39 = vector.broadcast %3 : vector<1x16xf32> to vector<256x16xf32>
    %40 = arith.mulf %39, %38 : vector<256x16xf32>
    %41 = math.exp %37 : vector<256x16xf32>
    %42 = arith.mulf %0, %41 : vector<256x16xf32>
    %43 = arith.addf %42, %40 : vector<256x16xf32>
    %cst_22 = arith.constant dense<0.000000e+00> : vector<256xf32>
    %44 = vector.multi_reduction <add>, %37, %cst_22 [1] : vector<256x16xf32> to vector<256xf32>
    %45 = vector.shape_cast %44 : vector<256xf32> to vector<256x1xf32>
    %46 = vector.broadcast %3 : vector<1x16xf32> to vector<256x16xf32>
    %47 = arith.mulf %46, %43 : vector<256x16xf32>
    %48 = arith.addf %5, %47 : vector<256x16xf32>
    %c0_23 = arith.constant 0 : index
    %c0_24 = arith.constant 0 : index
    %49 = vector.load %arg9[%c0_23, %c0_24] : memref<256x16xf32, #tpu.memory_space<vmem>>, vector<256x16xf32>
    tpu.vector_store %arg9[%c0_23, %c0_24], %48 {strides = array<i32>} : memref<256x16xf32, #tpu.memory_space<vmem>>, vector<256x16xf32>,
    %c0_25 = arith.constant 0 : index
    %c0_26 = arith.constant 0 : index
    %50 = vector.load %arg10[%c0_25, %c0_26] : memref<256x1xf32, #tpu.memory_space<vmem>>, vector<256x1xf32>
    tpu.vector_store %arg10[%c0_25, %c0_26], %45 {strides = array<i32>} : memref<256x1xf32, #tpu.memory_space<vmem>>, vector<256x1xf32>,
    return
  }
  func.func @transform_0(%arg0: i32) -> (i32, i32) {
    %c0_i32 = arith.constant 0 : i32
    %c0_i32_0 = arith.constant 0 : i32
    return %arg0, %c0_i32 : i32, i32
  }
  func.func @transform_1(%arg0: i32) -> (i32, i32) {
    %c0_i32 = arith.constant 0 : i32
    %c0_i32_0 = arith.constant 0 : i32
    %c0_i32_1 = arith.constant 0 : i32
    return %c0_i32, %c0_i32_0 : i32, i32
  }
  func.func @transform_2(%arg0: i32) -> (i32, i32) {
    %c0_i32 = arith.constant 0 : i32
    %c0_i32_0 = arith.constant 0 : i32
    %c0_i32_1 = arith.constant 0 : i32
    return %c0_i32, %c0_i32_0 : i32, i32
  }
  func.func @transform_3(%arg0: i32) -> (i32, i32) {
    %c0_i32 = arith.constant 0 : i32
    %c0_i32_0 = arith.constant 0 : i32
    %c0_i32_1 = arith.constant 0 : i32
    return %c0_i32, %c0_i32_0 : i32, i32
  }
  func.func @transform_4(%arg0: i32) -> (i32, i32) {
    %c0_i32 = arith.constant 0 : i32
    %c0_i32_0 = arith.constant 0 : i32
    %c0_i32_1 = arith.constant 0 : i32
    return %c0_i32, %c0_i32_0 : i32, i32
  }
  func.func @transform_5(%arg0: i32) -> (i32, i32) {
    %c0_i32 = arith.constant 0 : i32
    %c0_i32_0 = arith.constant 0 : i32
    %c0_i32_1 = arith.constant 0 : i32
    return %c0_i32, %c0_i32_0 : i32, i32
  }
  func.func @transform_6(%arg0: i32) -> (i32, i32) {
    %c0_i32 = arith.constant 0 : i32
    %c0_i32_0 = arith.constant 0 : i32
    %c0_i32_1 = arith.constant 0 : i32
    return %c0_i32, %c0_i32_0 : i32, i32
  }
  func.func @transform_7(%arg0: i32) -> (i32, i32) {
    %c0_i32 = arith.constant 0 : i32
    %c0_i32_0 = arith.constant 0 : i32
    %c0_i32_1 = arith.constant 0 : i32
    return %c0_i32, %c0_i32_0 : i32, i32
  }
  func.func @transform_8(%arg0: i32) -> (i32, i32) {
    %c0_i32 = arith.constant 0 : i32
    %c0_i32_0 = arith.constant 0 : i32
    return %arg0, %c0_i32 : i32, i32
  }
  func.func @transform_9(%arg0: i32) -> (i32, i32) {
    %c0_i32 = arith.constant 0 : i32
    %c0_i32_0 = arith.constant 0 : i32
    return %arg0, %c0_i32 : i32, i32
  }
}

</mosaic_0001>

<llo_original>
// kernel: affine_coupling_forward.1
$region0: #{affine_coupling_forward.1}
  #allocation0 [shape = 'u32[]', space=smem, size = 0x4, offset = 0x4, fixed_abs, tag = 'smem constant byte address 0x4 - core index']
  #allocation1 [shape = 'u32[144,128]{1,0:T(1,128)}', space=vmem, size = 0x12000, scoped, tag = 'internal scratch']
  %s0 = inlined_call_operand.vmem [shape: f32[512,16], index: 0, kind: input, shape index: {}]
  %s1 = inlined_call_operand.vmem [shape: f32[1,16], index: 1, kind: input, shape index: {}]
  %s2 = inlined_call_operand.vmem [shape: bf16[16,32], index: 2, kind: input, shape index: {}]
  %s3 = inlined_call_operand.vmem [shape: f32[1,32], index: 3, kind: input, shape index: {}]
  %s4 = inlined_call_operand.vmem [shape: bf16[32,32], index: 4, kind: input, shape index: {}]
  %s5 = inlined_call_operand.vmem [shape: f32[1,32], index: 5, kind: input, shape index: {}]
  %s6 = inlined_call_operand.vmem [shape: bf16[32,32], index: 6, kind: input, shape index: {}]
  %s7 = inlined_call_operand.vmem [shape: f32[1,32], index: 7, kind: input, shape index: {}]
  %s8 = inlined_call_operand.vmem [shape: f32[512,16], index: 8, kind: output, shape index: {0}]
  %s9 = inlined_call_operand.vmem [shape: f32[512,1], index: 9, kind: output, shape index: {1}]
  %10 = xla_tuple %s8, %s9
  %s11 = sld [smem:[#allocation0]]
  $region73: #{affine_coupling_forward.1} parent=0
    _
  %s13 = ssub.s32 1, %s11
  %s14 = scalar_select 0, %s13, %s11
  loop: start=0, step=1, limit=4
  $region2: #{affine_coupling_forward.1} parent=0 // loop_pre_header
    _
  $region3: #{affine_coupling_forward.1} parent=0 // loop_header
    %s16 = sphi 0, %s20
    %p17 = scmp.ge.s32.totalorder %s16, 4
    %s26 = sphi 0, %s28
    %s29 = sphi 0, %s26
    %s30 = sphi 0, %s29
    %s46 = sphi 0, %s30
    %s50 = sphi 0, %s50
    %s52 = sphi 0, %s50
    %s53 = sphi 0, %s52
    %s67 = sphi 0, %s53
    %s71 = sphi 0, %s71
    %s73 = sphi 0, %s71
    %s74 = sphi 0, %s73
    %s88 = sphi 0, %s74
    %s92 = sphi 0, %s92
    %s94 = sphi 0, %s92
    %s95 = sphi 0, %s94
    %s109 = sphi 0, %s95
    %s113 = sphi 0, %s113
    %s115 = sphi 0, %s113
    %s116 = sphi 0, %s115
    %s130 = sphi 0, %s116
    %s134 = sphi 0, %s134
    %s136 = sphi 0, %s134
    %s137 = sphi 0, %s136
    %s151 = sphi 0, %s137
    %s155 = sphi 0, %s155
    %s157 = sphi 0, %s155
    %s158 = sphi 0, %s157
    %s172 = sphi 0, %s158
    %s176 = sphi 0, %s176
    %s178 = sphi 0, %s176
    %s179 = sphi 0, %s178
    %s193 = sphi 0, %s179
    %s199 = sphi 0, %s201
    %s202 = sphi 0, %s199
    %s203 = sphi 0, %s202
    %s219 = sphi 0, %s203
    %s225 = sphi 0, %s227
    %s228 = sphi 0, %s225
    %s229 = sphi 0, %s228
    %s245 = sphi 0, %s229
  $region4: #{affine_coupling_forward.1} parent=0 // loop_header_branch
    %19 = sbr.rel (%p17) target = $region8
  $region5: #{affine_coupling_forward.1} parent=0 // loop_body
    %s21 = ssub.s32 %s16, 1
    %s22 = ssub.s32 %s16, 2
    %s23 = sadd.s32 %s16, 1
    %s24 = ssub.s32 %s16, %s23
    %p25 = scmp.eq.s32.totalorder %s24, 0
    %s27 = sadd.s32 %s26, 1
    %s28 = scalar_select %p25, %s26, %s27
    %p31 = pneg %p25
    %p32 = scmp.eq.s32.totalorder %s16, 1
    %p33 = por %p31, %p32
    %p34 = scmp.ne.s32.totalorder %s26, %s29
    %p35 = scmp.eq.s32.totalorder %s16, 0
    %p36 = por %p34, %p35
    %p37 = scmp.ne.s32.totalorder %s26, %s29
    %p38 = scmp.eq.s32.totalorder %s21, 1
    %p39 = por %p37, %p38
    %p40 = scmp.ne.s32.totalorder %s29, %s30
    %p41 = scmp.eq.s32.totalorder %s21, 0
    %p42 = por %p40, %p41
    %p43 = scmp.ne.s32.totalorder %s29, %s30
    %p44 = scmp.eq.s32.totalorder %s22, 1
    %p45 = por %p43, %p44
    %p47 = scmp.ne.s32.totalorder %s30, %s46
    %p48 = scmp.eq.s32.totalorder %s22, 0
    %p49 = por %p47, %p48
    %s51 = sadd.s32 %s50, 1
    %p54 = scmp.eq.s32.totalorder %s16, 1
    %p55 = scmp.ne.s32.totalorder %s50, %s52
    %p56 = scmp.eq.s32.totalorder %s16, 0
    %p57 = por %p55, %p56
    %p58 = scmp.ne.s32.totalorder %s50, %s52
    %p59 = scmp.eq.s32.totalorder %s21, 1
    %p60 = por %p58, %p59
    %p61 = scmp.ne.s32.totalorder %s52, %s53
    %p62 = scmp.eq.s32.totalorder %s21, 0
    %p63 = por %p61, %p62
    %p64 = scmp.ne.s32.totalorder %s52, %s53
    %p65 = scmp.eq.s32.totalorder %s22, 1
    %p66 = por %p64, %p65
    %p68 = scmp.ne.s32.totalorder %s53, %s67
    %p69 = scmp.eq.s32.totalorder %s22, 0
    %p70 = por %p68, %p69
    %s72 = sadd.s32 %s71, 1
    %p75 = scmp.eq.s32.totalorder %s16, 1
    %p76 = scmp.ne.s32.totalorder %s71, %s73
    %p77 = scmp.eq.s32.totalorder %s16, 0
    %p78 = por %p76, %p77
    %p79 = scmp.ne.s32.totalorder %s71, %s73
    %p80 = scmp.eq.s32.totalorder %s21, 1
    %p81 = por %p79, %p80
    %p82 = scmp.ne.s32.totalorder %s73, %s74
    %p83 = scmp.eq.s32.totalorder %s21, 0
    %p84 = por %p82, %p83
    %p85 = scmp.ne.s32.totalorder %s73, %s74
    %p86 = scmp.eq.s32.totalorder %s22, 1
    %p87 = por %p85, %p86
    %p89 = scmp.ne.s32.totalorder %s74, %s88
    %p90 = scmp.eq.s32.totalorder %s22, 0
    %p91 = por %p89, %p90
    %s93 = sadd.s32 %s92, 1
    %p96 = scmp.eq.s32.totalorder %s16, 1
    %p97 = scmp.ne.s32.totalorder %s92, %s94
    %p98 = scmp.eq.s32.totalorder %s16, 0
    %p99 = por %p97, %p98
    %p100 = scmp.ne.s32.totalorder %s92, %s94
    %p101 = scmp.eq.s32.totalorder %s21, 1
    %p102 = por %p100, %p101
    %p103 = scmp.ne.s32.totalorder %s94, %s95
    %p104 = scmp.eq.s32.totalorder %s21, 0
    %p105 = por %p103, %p104
    %p106 = scmp.ne.s32.totalorder %s94, %s95
    %p107 = scmp.eq.s32.totalorder %s22, 1
    %p108 = por %p106, %p107
    %p110 = scmp.ne.s32.totalorder %s95, %s109
    %p111 = scmp.eq.s32.totalorder %s22, 0
    %p112 = por %p110, %p111
    %s114 = sadd.s32 %s113, 1
    %p117 = scmp.eq.s32.totalorder %s16, 1
    %p118 = scmp.ne.s32.totalorder %s113, %s115
    %p119 = scmp.eq.s32.totalorder %s16, 0
    %p120 = por %p118, %p119
    %p121 = scmp.ne.s32.totalorder %s113, %s115
    %p122 = scmp.eq.s32.totalorder %s21, 1
    %p123 = por %p121, %p122
    %p124 = scmp.ne.s32.totalorder %s115, %s116
    %p125 = scmp.eq.s32.totalorder %s21, 0
    %p126 = por %p124, %p125
    %p127 = scmp.ne.s32.totalorder %s115, %s116
    %p128 = scmp.eq.s32.totalorder %s22, 1
    %p129 = por %p127, %p128
    %p131 = scmp.ne.s32.totalorder %s116, %s130
    %p132 = scmp.eq.s32.totalorder %s22, 0
    %p133 = por %p131, %p132
    %s135 = sadd.s32 %s134, 1
    %p138 = scmp.eq.s32.totalorder %s16, 1
    %p139 = scmp.ne.s32.totalorder %s134, %s136
    %p140 = scmp.eq.s32.totalorder %s16, 0
    %p141 = por %p139, %p140
    %p142 = scmp.ne.s32.totalorder %s134, %s136
    %p143 = scmp.eq.s32.totalorder %s21, 1
    %p144 = por %p142, %p143
    %p145 = scmp.ne.s32.totalorder %s136, %s137
    %p146 = scmp.eq.s32.totalorder %s21, 0
    %p147 = por %p145, %p146
    %p148 = scmp.ne.s32.totalorder %s136, %s137
    %p149 = scmp.eq.s32.totalorder %s22, 1
    %p150 = por %p148, %p149
    %p152 = scmp.ne.s32.totalorder %s137, %s151
    %p153 = scmp.eq.s32.totalorder %s22, 0
    %p154 = por %p152, %p153
    %s156 = sadd.s32 %s155, 1
    %p159 = scmp.eq.s32.totalorder %s16, 1
    %p160 = scmp.ne.s32.totalorder %s155, %s157
    %p161 = scmp.eq.s32.totalorder %s16, 0
    %p162 = por %p160, %p161
    %p163 = scmp.ne.s32.totalorder %s155, %s157
    %p164 = scmp.eq.s32.totalorder %s21, 1
    %p165 = por %p163, %p164
    %p166 = scmp.ne.s32.totalorder %s157, %s158
    %p167 = scmp.eq.s32.totalorder %s21, 0
    %p168 = por %p166, %p167
    %p169 = scmp.ne.s32.totalorder %s157, %s158
    %p170 = scmp.eq.s32.totalorder %s22, 1
    %p171 = por %p169, %p170
    %p173 = scmp.ne.s32.totalorder %s158, %s172
    %p174 = scmp.eq.s32.totalorder %s22, 0
    %p175 = por %p173, %p174
    %s177 = sadd.s32 %s176, 1
    %p180 = scmp.eq.s32.totalorder %s16, 1
    %p181 = scmp.ne.s32.totalorder %s176, %s178
    %p182 = scmp.eq.s32.totalorder %s16, 0
    %p183 = por %p181, %p182
    %p184 = scmp.ne.s32.totalorder %s176, %s178
    %p185 = scmp.eq.s32.totalorder %s21, 1
    %p186 = por %p184, %p185
    %p187 = scmp.ne.s32.totalorder %s178, %s179
    %p188 = scmp.eq.s32.totalorder %s21, 0
    %p189 = por %p187, %p188
    %p190 = scmp.ne.s32.totalorder %s178, %s179
    %p191 = scmp.eq.s32.totalorder %s22, 1
    %p192 = por %p190, %p191
    %p194 = scmp.ne.s32.totalorder %s179, %s193
    %p195 = scmp.eq.s32.totalorder %s22, 0
    %p196 = por %p194, %p195
    %s197 = ssub.s32 %s16, %s23
    %p198 = scmp.eq.s32.totalorder %s197, 0
    %s200 = sadd.s32 %s199, 1
    %s201 = scalar_select %p198, %s199, %s200
    %p204 = pneg %p198
    %p205 = scmp.eq.s32.totalorder %s16, 1
    %p206 = por %p204, %p205
    %p207 = scmp.ne.s32.totalorder %s199, %s202
    %p208 = scmp.eq.s32.totalorder %s16, 0
    %p209 = por %p207, %p208
    %p210 = scmp.ne.s32.totalorder %s199, %s202
    %p211 = scmp.eq.s32.totalorder %s21, 1
    %p212 = por %p210, %p211
    %p213 = scmp.ne.s32.totalorder %s202, %s203
    %p214 = scmp.eq.s32.totalorder %s21, 0
    %p215 = por %p213, %p214
    %p216 = scmp.ne.s32.totalorder %s202, %s203
    %p217 = scmp.eq.s32.totalorder %s22, 1
    %p218 = por %p216, %p217
    %p220 = scmp.ne.s32.totalorder %s203, %s219
    %p221 = scmp.eq.s32.totalorder %s22, 0
    %p222 = por %p220, %p221
    %s223 = ssub.s32 %s16, %s23
    %p224 = scmp.eq.s32.totalorder %s223, 0
    %s226 = sadd.s32 %s225, 1
    %s227 = scalar_select %p224, %s225, %s226
    %p230 = pneg %p224
    %p231 = scmp.eq.s32.totalorder %s16, 1
    %p232 = por %p230, %p231
    %p233 = scmp.ne.s32.totalorder %s225, %s228
    %p234 = scmp.eq.s32.totalorder %s16, 0
    %p235 = por %p233, %p234
    %p236 = scmp.ne.s32.totalorder %s225, %s228
    %p237 = scmp.eq.s32.totalorder %s21, 1
    %p238 = por %p236, %p237
    %p239 = scmp.ne.s32.totalorder %s228, %s229
    %p240 = scmp.eq.s32.totalorder %s21, 0
    %p241 = por %p239, %p240
    %p242 = scmp.ne.s32.totalorder %s228, %s229
    %p243 = scmp.eq.s32.totalorder %s22, 1
    %p244 = por %p242, %p243
    %p246 = scmp.ne.s32.totalorder %s229, %s245
    %p247 = scmp.eq.s32.totalorder %s22, 0
    %p248 = por %p246, %p247
    %p249 = scmp.le.s32.totalorder 1, %s16
    %p250 = scmp.lt.s32.totalorder %s16, 3
    %p251 = pnand %p249, %p250
    %p252 = pneg %p251
    // Predicated region
    $region9: #{affine_coupling_forward.1} parent=5 // pred_check
      _
    $region10: #{affine_coupling_forward.1} parent=5 // pred_check_branch
      %254 = sbr.rel (%p251) target = $region12
    $region11: #{affine_coupling_forward.1} parent=5 // pred_region
      %s255 = ssub.s32 %s16, 1
      // Predicated region
      $region13: #{affine_coupling_forward.1} parent=11 // pred_check
        %p256 = pneg %p63
      $region14: #{affine_coupling_forward.1} parent=11 // pred_check_branch
        %258 = sbr.rel (%p256) target = $region16
      $region15: #{affine_coupling_forward.1} parent=11 // pred_region
        _
      $region16: #{affine_coupling_forward.1} parent=11 // pred_fallthru
        _
      // Predicated region
      $region17: #{affine_coupling_forward.1} parent=11 // pred_check
        %p259 = pneg %p84
      $region18: #{affine_coupling_forward.1} parent=11 // pred_check_branch
        %261 = sbr.rel (%p259) target = $region20
      $region19: #{affine_coupling_forward.1} parent=11 // pred_region
        _
      $region20: #{affine_coupling_forward.1} parent=11 // pred_fallthru
        _
      // Predicated region
      $region21: #{affine_coupling_forward.1} parent=11 // pred_check
        %p262 = pneg %p105
      $region22: #{affine_coupling_forward.1} parent=11 // pred_check_branch
        %264 = sbr.rel (%p262) target = $region24
      $region23: #{affine_coupling_forward.1} parent=11 // pred_region
        _
      $region24: #{affine_coupling_forward.1} parent=11 // pred_fallthru
        _
      // Predicated region
      $region25: #{affine_coupling_forward.1} parent=11 // pred_check
        %p265 = pneg %p126
      $region26: #{affine_coupling_forward.1} parent=11 // pred_check_branch
        %267 = sbr.rel (%p265) target = $region28
      $region27: #{affine_coupling_forward.1} parent=11 // pred_region
        _
      $region28: #{affine_coupling_forward.1} parent=11 // pred_fallthru
        _
      // Predicated region
      $region29: #{affine_coupling_forward.1} parent=11 // pred_check
        %p268 = pneg %p147
      $region30: #{affine_coupling_forward.1} parent=11 // pred_check_branch
        %270 = sbr.rel (%p268) target = $region32
      $region31: #{affine_coupling_forward.1} parent=11 // pred_region
        _
      $region32: #{affine_coupling_forward.1} parent=11 // pred_fallthru
        _
      // Predicated region
      $region33: #{affine_coupling_forward.1} parent=11 // pred_check
        %p271 = pneg %p168
      $region34: #{affine_coupling_forward.1} parent=11 // pred_check_branch
        %273 = sbr.rel (%p271) target = $region36
      $region35: #{affine_coupling_forward.1} parent=11 // pred_region
        _
      $region36: #{affine_coupling_forward.1} parent=11 // pred_fallthru
        _
      // Predicated region
      $region37: #{affine_coupling_forward.1} parent=11 // pred_check
        %p274 = pneg %p189
      $region38: #{affine_coupling_forward.1} parent=11 // pred_check_branch
        %276 = sbr.rel (%p274) target = $region40
      $region39: #{affine_coupling_forward.1} parent=11 // pred_region
        _
      $region40: #{affine_coupling_forward.1} parent=11 // pred_fallthru
        _
    $region12: #{affine_coupling_forward.1} parent=5 // pred_fallthru
      _
    %p277 = scmp.lt.s32.totalorder %s16, 2
    // Predicated region
    $region41: #{affine_coupling_forward.1} parent=5 // pred_check
      %p278 = pneg %p277
    $region42: #{affine_coupling_forward.1} parent=5 // pred_check_branch
      %280 = sbr.rel (%p278) target = $region44
    $region43: #{affine_coupling_forward.1} parent=5 // pred_region
      // Predicated region
      $region45: #{affine_coupling_forward.1} parent=43 // pred_check
        %p281 = pneg %p36
      $region46: #{affine_coupling_forward.1} parent=43 // pred_check_branch
        %283 = sbr.rel (%p281) target = $region48
      $region47: #{affine_coupling_forward.1} parent=43 // pred_region
        %s284 = smul.u32 32, %s16
        %p285 = scmp.lt.s32.totalorder %s284, 63
        %s286 = scalar_select %p285, %s284, 63
        %s287 = smul.addr %s286, 8
        %s288 = scalar_lea.vmem %s0, %s287
        %s289 = smul.u32 32, %s16
      $region48: #{affine_coupling_forward.1} parent=43 // pred_fallthru
        _
    $region44: #{affine_coupling_forward.1} parent=5 // pred_fallthru
      _
    %p290 = scmp.le.s32.totalorder 1, %s16
    %p291 = scmp.lt.s32.totalorder %s16, 3
    %p292 = pnand %p290, %p291
    %p293 = pneg %p292
    // Predicated region
    $region49: #{affine_coupling_forward.1} parent=5 // pred_check
      _
    $region50: #{affine_coupling_forward.1} parent=5 // pred_check_branch
      %295 = sbr.rel (%p292) target = $region52
    $region51: #{affine_coupling_forward.1} parent=5 // pred_region
      %s296 = ssub.s32 %s16, 1
      %s297 = smul.u32 32, %s21
      %p298 = scmp.lt.s32.totalorder %s297, 63
      %s299 = scalar_select %p298, %s297, 63
      %s300 = smul.addr %s299, 8
      %s301 = scalar_lea.vmem %s0, %s300
      %p302 = pneg %p42
      %p303 = pneg %p39
      %p304 = pneg %p63
      %p305 = pneg %p60
      %p306 = pneg %p84
      %p307 = pneg %p81
      %p308 = pneg %p105
      %p309 = pneg %p102
      %p310 = pneg %p126
      %p311 = pneg %p123
      %p312 = pneg %p147
      %p313 = pneg %p144
      %p314 = pneg %p168
      %p315 = pneg %p165
      %p316 = pneg %p189
      %p317 = pneg %p186
      %p318 = pneg %p215
      %p319 = pneg %p212
      %s320 = smul.u32 32, %s21
      %p321 = scmp.lt.s32.totalorder %s320, 63
      %s322 = scalar_select %p321, %s320, 63
      %s323 = smul.addr %s322, 8
      %s324 = scalar_lea.vmem %s8, %s323
      %p325 = pneg %p241
      %p326 = pneg %p238
      %s327 = smul.u32 32, %s21
      %p328 = scmp.lt.s32.totalorder %s327, 63
      %s329 = scalar_select %p328, %s327, 63
      %s330 = smul.addr %s329, 8
      %s331 = scalar_lea.vmem %s9, %s330
      %s332 = smul.u32 32, %s21
      %p333 = scmp.lt.s32.totalorder %s332, 63
      %s334 = scalar_select %p333, %s332, 63
      %s335 = smul.addr %s334, 8
      %s336 = scalar_lea.vmem %s0, %s335
      %s337 = smul.u32 32, %s21
      %s338 = smul.u32 32, %s21
      %p339 = scmp.lt.s32.totalorder %s338, 63
      %s340 = scalar_select %p339, %s338, 63
      %s341 = smul.addr %s340, 8
      %s342 = scalar_lea.vmem %s8, %s341
      %s343 = smul.u32 32, %s21
      %s344 = smul.u32 32, %s21
      %p345 = scmp.lt.s32.totalorder %s344, 63
      %s346 = scalar_select %p345, %s344, 63
      %s347 = smul.addr %s346, 8
      %s348 = scalar_lea.vmem %s9, %s347
      %s349 = smul.u32 32, %s21
      %v351 = vld [vmem:[%s336] sm:$0xff]
      %v352 = vld [vmem:[%s336 + $0x8] sm:$0xff]
      %v353 = vld [vmem:[%s336 + $0x10] sm:$0xff]
      %v354 = vld [vmem:[%s336 + $0x18] sm:$0xff]
      %v355 = vld [vmem:[%s336 + $0x20] sm:$0xff]
      %v356 = vld [vmem:[%s336 + $0x28] sm:$0xff]
      %v357 = vld [vmem:[%s336 + $0x30] sm:$0xff]
      %v358 = vld [vmem:[%s336 + $0x38] sm:$0xff]
      %v359 = vld [vmem:[%s336 + $0x40] sm:$0xff]
      %v360 = vld [vmem:[%s336 + $0x48] sm:$0xff]
      %v361 = vld [vmem:[%s336 + $0x50] sm:$0xff]
      %v362 = vld [vmem:[%s336 + $0x58] sm:$0xff]
      %v363 = vld [vmem:[%s336 + $0x60] sm:$0xff]
      %v364 = vld [vmem:[%s336 + $0x68] sm:$0xff]
      %v365 = vld [vmem:[%s336 + $0x70] sm:$0xff]
      %v366 = vld [vmem:[%s336 + $0x78] sm:$0xff]
      %v367 = vld [vmem:[%s336 + $0x80] sm:$0xff]
      %v368 = vld [vmem:[%s336 + $0x88] sm:$0xff]
      %v369 = vld [vmem:[%s336 + $0x90] sm:$0xff]
      %v370 = vld [vmem:[%s336 + $0x98] sm:$0xff]
      %v371 = vld [vmem:[%s336 + $0xa0] sm:$0xff]
      %v372 = vld [vmem:[%s336 + $0xa8] sm:$0xff]
      %v373 = vld [vmem:[%s336 + $0xb0] sm:$0xff]
      %v374 = vld [vmem:[%s336 + $0xb8] sm:$0xff]
      %v375 = vld [vmem:[%s336 + $0xc0] sm:$0xff]
      %v376 = vld [vmem:[%s336 + $0xc8] sm:$0xff]
      %v377 = vld [vmem:[%s336 + $0xd0] sm:$0xff]
      %v378 = vld [vmem:[%s336 + $0xd8] sm:$0xff]
      %v379 = vld [vmem:[%s336 + $0xe0] sm:$0xff]
      %v380 = vld [vmem:[%s336 + $0xe8] sm:$0xff]
      %v381 = vld [vmem:[%s336 + $0xf0] sm:$0xff]
      %v382 = vld [vmem:[%s336 + $0xf8] sm:$0xff]
      %v383 = vld [vmem:[%s1] sm:$0x1]
      %v384 = vsub.f32 1.0, %v383
      %v386 = vlaneseq
      %v387 = vshrl.u32 %v386, 7
      %v388 = vsub.s32 0, %v387
      %v389 = vrot.slane %v383, %v388
      %v391 = vmul.f32 %v351, %v389
      %v392 = vmul.f32 %v352, %v389
      %v393 = vmul.f32 %v353, %v389
      %v394 = vmul.f32 %v354, %v389
      %v395 = vmul.f32 %v355, %v389
      %v396 = vmul.f32 %v356, %v389
      %v397 = vmul.f32 %v357, %v389
      %v398 = vmul.f32 %v358, %v389
      %v399 = vmul.f32 %v359, %v389
      %v400 = vmul.f32 %v360, %v389
      %v401 = vmul.f32 %v361, %v389
      %v402 = vmul.f32 %v362, %v389
      %v403 = vmul.f32 %v363, %v389
      %v404 = vmul.f32 %v364, %v389
      %v405 = vmul.f32 %v365, %v389
      %v406 = vmul.f32 %v366, %v389
      %v407 = vmul.f32 %v367, %v389
      %v408 = vmul.f32 %v368, %v389
      %v409 = vmul.f32 %v369, %v389
      %v410 = vmul.f32 %v370, %v389
      %v411 = vmul.f32 %v371, %v389
      %v412 = vmul.f32 %v372, %v389
      %v413 = vmul.f32 %v373, %v389
      %v414 = vmul.f32 %v374, %v389
      %v415 = vmul.f32 %v375, %v389
      %v416 = vmul.f32 %v376, %v389
      %v417 = vmul.f32 %v377, %v389
      %v418 = vmul.f32 %v378, %v389
      %v419 = vmul.f32 %v379, %v389
      %v420 = vmul.f32 %v380, %v389
      %v421 = vmul.f32 %v381, %v389
      %v422 = vmul.f32 %v382, %v389
      %v423 = vpack.c.bf16 %v392, %v391
      %v424 = vpack.c.bf16 %v394, %v393
      %v425 = vpack.c.bf16 %v396, %v395
      %v426 = vpack.c.bf16 %v398, %v397
      %v427 = vpack.c.bf16 %v400, %v399
      %v428 = vpack.c.bf16 %v402, %v401
      %v429 = vpack.c.bf16 %v404, %v403
      %v430 = vpack.c.bf16 %v406, %v405
      %v431 = vpack.c.bf16 %v408, %v407
      %v432 = vpack.c.bf16 %v410, %v409
      %v433 = vpack.c.bf16 %v412, %v411
      %v434 = vpack.c.bf16 %v414, %v413
      %v435 = vpack.c.bf16 %v416, %v415
      %v436 = vpack.c.bf16 %v418, %v417
      %v437 = vpack.c.bf16 %v420, %v419
      %v438 = vpack.c.bf16 %v422, %v421
      %v439 = vld [vmem:[%s2] sm:$0xf]
      %v440 = vld [vmem:[%s2 + $0x4] sm:$0xf]
      %v441 = vld [vmem:[%s3] sm:$0x1]
      %v443 = vlaneseq
      %v444 = vshrl.u32 %v443, 7
      %v445 = vsub.s32 0, %v444
      %v446 = vrot.slane %v441, %v445
      %v450 = vunpack.c.l.b16 %v439
      %v451 = vunpack.c.l.b16 %v440
      %v452 = vpack.c.b16 %v451, %v450
      %vm454 = vcmask 130048
      %v456 = vsel %vm454, %v423, 0
      %v459 = vsel %vm454, %v424, 0
      %v462 = vsel %vm454, %v425, 0
      %v465 = vsel %vm454, %v426, 0
      %v468 = vsel %vm454, %v427, 0
      %v471 = vsel %vm454, %v428, 0
      %v474 = vsel %vm454, %v429, 0
      %v477 = vsel %vm454, %v430, 0
      %v480 = vsel %vm454, %v431, 0
      %v483 = vsel %vm454, %v432, 0
      %v486 = vsel %vm454, %v433, 0
      %v489 = vsel %vm454, %v434, 0
      %v492 = vsel %vm454, %v435, 0
      %v495 = vsel %vm454, %v436, 0
      %v498 = vsel %vm454, %v437, 0
      %v501 = vsel %vm454, %v438, 0
      %503 = vmatprep.subr.bf16.mxu0 0
      %504 = vmatpush1.bf16.msra.mxu0 %v452
      %505 = vmatprep.subr.bf16.mxu0 0
      %506 = vmatpush1.bf16.msra.mxu0 0
      %507 = vmatprep.subr.bf16.mxu0 0
      %508 = vmatpush1.bf16.msra.mxu0 0
      %509 = vmatprep.subr.bf16.mxu0 0
      %510 = vmatpush1.bf16.msra.mxu0 0
      %511 = vmatprep.subr.bf16.mxu0 0
      %512 = vmatpush1.bf16.msra.mxu0 0
      %513 = vmatprep.subr.bf16.mxu0 0
      %514 = vmatpush1.bf16.msra.mxu0 0
      %515 = vmatprep.subr.bf16.mxu0 0
      %516 = vmatpush1.bf16.msra.mxu0 0
      %517 = vmatprep.subr.bf16.mxu0 0
      %518 = vmatpush1.bf16.msra.mxu0 0
      %519 = vmatprep.subr.bf16.mxu0 0
      %520 = vmatpush1.bf16.msra.mxu0 0
      %521 = vmatprep.subr.bf16.mxu0 0
      %522 = vmatpush1.bf16.msra.mxu0 0
      %523 = vmatprep.subr.bf16.mxu0 0
      %524 = vmatpush1.bf16.msra.mxu0 0
      %525 = vmatprep.subr.bf16.mxu0 0
      %526 = vmatpush1.bf16.msra.mxu0 0
      %527 = vmatprep.subr.bf16.mxu0 0
      %528 = vmatpush1.bf16.msra.mxu0 0
      %529 = vmatprep.subr.bf16.mxu0 0
      %530 = vmatpush1.bf16.msra.mxu0 0
      %531 = vmatprep.subr.bf16.mxu0 0
      %532 = vmatpush1.bf16.msra.mxu0 0
      %533 = vmatprep.subr.bf16.mxu0 0
      %534 = vmatpush1.bf16.msra.mxu0 0
      %535 = vmatprep.mubr.bf16.mxu0 0
      %536 = vmatmul.mubr.bf16.gmra.mrb[0].mxu0 %v456
      %v537 = vpop.f32.mrb[0].mxu0
      %v538 = vadd.f32 %v446, %v537
      %v539 = vpop.f32.mrb[0].mxu0
      %v540 = vpop.f32.mrb[0].mxu0
      %v541 = vadd.f32 %v446, %v540
      %v542 = vpop.f32.mrb[0].mxu0
      %543 = vmatprep.mubr.bf16.mxu0 0
      %544 = vmatmul.mubr.bf16.gmra.mrb[0].mxu0 %v459
      %v545 = vpop.f32.mrb[0].mxu0
      %v546 = vadd.f32 %v446, %v545
      %v547 = vpop.f32.mrb[0].mxu0
      %v548 = vpop.f32.mrb[0].mxu0
      %v549 = vadd.f32 %v446, %v548
      %v550 = vpop.f32.mrb[0].mxu0
      %551 = vmatprep.mubr.bf16.mxu0 0
      %552 = vmatmul.mubr.bf16.gmra.mrb[0].mxu0 %v462
      %v553 = vpop.f32.mrb[0].mxu0
      %v554 = vadd.f32 %v446, %v553
      %v555 = vpop.f32.mrb[0].mxu0
      %v556 = vpop.f32.mrb[0].mxu0
      %v557 = vadd.f32 %v446, %v556
      %v558 = vpop.f32.mrb[0].mxu0
      %559 = vmatprep.mubr.bf16.mxu0 0
      %560 = vmatmul.mubr.bf16.gmra.mrb[0].mxu0 %v465
      %v561 = vpop.f32.mrb[0].mxu0
      %v562 = vadd.f32 %v446, %v561
      %v563 = vpop.f32.mrb[0].mxu0
      %v564 = vpop.f32.mrb[0].mxu0
      %v565 = vadd.f32 %v446, %v564
      %v566 = vpop.f32.mrb[0].mxu0
      %567 = vmatprep.mubr.bf16.mxu0 0
      %568 = vmatmul.mubr.bf16.gmra.mrb[0].mxu0 %v468
      %v569 = vpop.f32.mrb[0].mxu0
      %v570 = vadd.f32 %v446, %v569
      %v571 = vpop.f32.mrb[0].mxu0
      %v572 = vpop.f32.mrb[0].mxu0
      %v573 = vadd.f32 %v446, %v572
      %v574 = vpop.f32.mrb[0].mxu0
      %575 = vmatprep.mubr.bf16.mxu0 0
      %576 = vmatmul.mubr.bf16.gmra.mrb[0].mxu0 %v471
      %v577 = vpop.f32.mrb[0].mxu0
      %v578 = vadd.f32 %v446, %v577
      %v579 = vpop.f32.mrb[0].mxu0
      %v580 = vpop.f32.mrb[0].mxu0
      %v581 = vadd.f32 %v446, %v580
      %v582 = vpop.f32.mrb[0].mxu0
      %583 = vmatprep.mubr.bf16.mxu0 0
      %584 = vmatmul.mubr.bf16.gmra.mrb[0].mxu0 %v474
      %v585 = vpop.f32.mrb[0].mxu0
      %v586 = vadd.f32 %v446, %v585
      %v587 = vpop.f32.mrb[0].mxu0
      %v588 = vpop.f32.mrb[0].mxu0
      %v589 = vadd.f32 %v446, %v588
      %v590 = vpop.f32.mrb[0].mxu0
      %591 = vmatprep.mubr.bf16.mxu0 0
      %592 = vmatmul.mubr.bf16.gmra.mrb[0].mxu0 %v477
      %v593 = vpop.f32.mrb[0].mxu0
      %v594 = vadd.f32 %v446, %v593
      %v595 = vpop.f32.mrb[0].mxu0
      %v596 = vpop.f32.mrb[0].mxu0
      %v597 = vadd.f32 %v446, %v596
      %v598 = vpop.f32.mrb[0].mxu0
      %599 = vmatprep.mubr.bf16.mxu0 0
      %600 = vmatmul.mubr.bf16.gmra.mrb[0].mxu0 %v480
      %v601 = vpop.f32.mrb[0].mxu0
      %v602 = vadd.f32 %v446, %v601
      %v603 = vpop.f32.mrb[0].mxu0
      %v604 = vpop.f32.mrb[0].mxu0
      %v605 = vadd.f32 %v446, %v604
      %v606 = vpop.f32.mrb[0].mxu0
      %607 = vmatprep.mubr.bf16.mxu0 0
      %608 = vmatmul.mubr.bf16.gmra.mrb[0].mxu0 %v483
      %v609 = vpop.f32.mrb[0].mxu0
      %v610 = vadd.f32 %v446, %v609
      %v611 = vpop.f32.mrb[0].mxu0
      %v612 = vpop.f32.mrb[0].mxu0
      %v613 = vadd.f32 %v446, %v612
      %v614 = vpop.f32.mrb[0].mxu0
      %615 = vmatprep.mubr.bf16.mxu0 0
      %616 = vmatmul.mubr.bf16.gmra.mrb[0].mxu0 %v486
      %v617 = vpop.f32.mrb[0].mxu0
      %v618 = vadd.f32 %v446, %v617
      %v619 = vpop.f32.mrb[0].mxu0
      %v620 = vpop.f32.mrb[0].mxu0
      %v621 = vadd.f32 %v446, %v620
      %v622 = vpop.f32.mrb[0].mxu0
      %623 = vmatprep.mubr.bf16.mxu0 0
      %624 = vmatmul.mubr.bf16.gmra.mrb[0].mxu0 %v489
      %v625 = vpop.f32.mrb[0].mxu0
      %v626 = vadd.f32 %v446, %v625
      %v627 = vpop.f32.mrb[0].mxu0
      %v628 = vpop.f32.mrb[0].mxu0
      %v629 = vadd.f32 %v446, %v628
      %v630 = vpop.f32.mrb[0].mxu0
      %631 = vmatprep.mubr.bf16.mxu0 0
      %632 = vmatmul.mubr.bf16.gmra.mrb[0].mxu0 %v492
      %v633 = vpop.f32.mrb[0].mxu0
      %v634 = vadd.f32 %v446, %v633
      %v635 = vpop.f32.mrb[0].mxu0
      %v636 = vpop.f32.mrb[0].mxu0
      %v637 = vadd.f32 %v446, %v636
      %v638 = vpop.f32.mrb[0].mxu0
      %639 = vmatprep.mubr.bf16.mxu0 0
      %640 = vmatmul.mubr.bf16.gmra.mrb[0].mxu0 %v495
      %v641 = vpop.f32.mrb[0].mxu0
      %v642 = vadd.f32 %v446, %v641
      %v643 = vpop.f32.mrb[0].mxu0
      %v644 = vpop.f32.mrb[0].mxu0
      %v645 = vadd.f32 %v446, %v644
      %v646 = vpop.f32.mrb[0].mxu0
      %647 = vmatprep.mubr.bf16.mxu0 0
      %648 = vmatmul.mubr.bf16.gmra.mrb[0].mxu0 %v498
      %v649 = vpop.f32.mrb[0].mxu0
      %v650 = vadd.f32 %v446, %v649
      %v651 = vpop.f32.mrb[0].mxu0
      %v652 = vpop.f32.mrb[0].mxu0
      %v653 = vadd.f32 %v446, %v652
      %v654 = vpop.f32.mrb[0].mxu0
      %655 = vmatprep.mubr.bf16.mxu0 0
      %656 = vmatmul.mubr.bf16.gmra.mrb[0].mxu0 %v501
      %v657 = vpop.f32.mrb[0].mxu0
      %v658 = vadd.f32 %v446, %v657
      %v659 = vpop.f32.mrb[0].mxu0
      %v660 = vpop.f32.mrb[0].mxu0
      %v661 = vadd.f32 %v446, %v660
      %v662 = vpop.f32.mrb[0].mxu0
      %663 = vdwg.mxu0
      %vm664 = vcmp.gt.f32.partialorder %v538, 0.0
      %vm665 = vcmp.gt.f32.partialorder %v541, 0.0
      %vm666 = vcmp.gt.f32.partialorder %v546, 0.0
      %vm667 = vcmp.gt.f32.partialorder %v549, 0.0
      %vm668 = vcmp.gt.f32.partialorder %v554, 0.0
      %vm669 = vcmp.gt.f32.partialorder %v557, 0.0
      %vm670 = vcmp.gt.f32.partialorder %v562, 0.0
      %vm671 = vcmp.gt.f32.partialorder %v565, 0.0
      %vm672 = vcmp.gt.f32.partialorder %v570, 0.0
      %vm673 = vcmp.gt.f32.partialorder %v573, 0.0
      %vm674 = vcmp.gt.f32.partialorder %v578, 0.0
      %vm675 = vcmp.gt.f32.partialorder %v581, 0.0
      %vm676 = vcmp.gt.f32.partialorder %v586, 0.0
      %vm677 = vcmp.gt.f32.partialorder %v589, 0.0
      %vm678 = vcmp.gt.f32.partialorder %v594, 0.0
      %vm679 = vcmp.gt.f32.partialorder %v597, 0.0
      %vm680 = vcmp.gt.f32.partialorder %v602, 0.0
      %vm681 = vcmp.gt.f32.partialorder %v605, 0.0
      %vm682 = vcmp.gt.f32.partialorder %v610, 0.0
      %vm683 = vcmp.gt.f32.partialorder %v613, 0.0
      %vm684 = vcmp.gt.f32.partialorder %v618, 0.0
      %vm685 = vcmp.gt.f32.partialorder %v621, 0.0
      %vm686 = vcmp.gt.f32.partialorder %v626, 0.0
      %vm687 = vcmp.gt.f32.partialorder %v629, 0.0
      %vm688 = vcmp.gt.f32.partialorder %v634, 0.0
      %vm689 = vcmp.gt.f32.partialorder %v637, 0.0
      %vm690 = vcmp.gt.f32.partialorder %v642, 0.0
      %vm691 = vcmp.gt.f32.partialorder %v645, 0.0
      %vm692 = vcmp.gt.f32.partialorder %v650, 0.0
      %vm693 = vcmp.gt.f32.partialorder %v653, 0.0
      %vm694 = vcmp.gt.f32.partialorder %v658, 0.0
      %vm695 = vcmp.gt.f32.partialorder %v661, 0.0
      %v696 = vmul.f32 %v538, 0.01
      %v697 = vmul.f32 %v541, 0.01
      %v698 = vmul.f32 %v546, 0.01
      %v699 = vmul.f32 %v549, 0.01
      %v700 = vmul.f32 %v554, 0.01
      %v701 = vmul.f32 %v557, 0.01
      %v702 = vmul.f32 %v562, 0.01
      %v703 = vmul.f32 %v565, 0.01
      %v704 = vmul.f32 %v570, 0.01
      %v705 = vmul.f32 %v573, 0.01
      %v706 = vmul.f32 %v578, 0.01
      %v707 = vmul.f32 %v581, 0.01
      %v708 = vmul.f32 %v586, 0.01
      %v709 = vmul.f32 %v589, 0.01
      %v710 = vmul.f32 %v594, 0.01
      %v711 = vmul.f32 %v597, 0.01
      %v712 = vmul.f32 %v602, 0.01
      %v713 = vmul.f32 %v605, 0.01
      %v714 = vmul.f32 %v610, 0.01
      %v715 = vmul.f32 %v613, 0.01
      %v716 = vmul.f32 %v618, 0.01
      %v717 = vmul.f32 %v621, 0.01
      %v718 = vmul.f32 %v626, 0.01
      %v719 = vmul.f32 %v629, 0.01
      %v720 = vmul.f32 %v634, 0.01
      %v721 = vmul.f32 %v637, 0.01
      %v722 = vmul.f32 %v642, 0.01
      %v723 = vmul.f32 %v645, 0.01
      %v724 = vmul.f32 %v650, 0.01
      %v725 = vmul.f32 %v653, 0.01
      %v726 = vmul.f32 %v658, 0.01
      %v727 = vmul.f32 %v661, 0.01
      %v728 = vsel %vm664, %v538, %v696
      %v729 = vsel %vm665, %v541, %v697
      %v730 = vsel %vm666, %v546, %v698
      %v731 = vsel %vm667, %v549, %v699
      %v732 = vsel %vm668, %v554, %v700
      %v733 = vsel %vm669, %v557, %v701
      %v734 = vsel %vm670, %v562, %v702
      %v735 = vsel %vm671, %v565, %v703
      %v736 = vsel %vm672, %v570, %v704
      %v737 = vsel %vm673, %v573, %v705
      %v738 = vsel %vm674, %v578, %v706
      %v739 = vsel %vm675, %v581, %v707
      %v740 = vsel %vm676, %v586, %v708
      %v741 = vsel %vm677, %v589, %v709
      %v742 = vsel %vm678, %v594, %v710
      %v743 = vsel %vm679, %v597, %v711
      %v744 = vsel %vm680, %v602, %v712
      %v745 = vsel %vm681, %v605, %v713
      %v746 = vsel %vm682, %v610, %v714
      %v747 = vsel %vm683, %v613, %v715
      %v748 = vsel %vm684, %v618, %v716
      %v749 = vsel %vm685, %v621, %v717
      %v750 = vsel %vm686, %v626, %v718
      %v751 = vsel %vm687, %v629, %v719
      %v752 = vsel %vm688, %v634, %v720
      %v753 = vsel %vm689, %v637, %v721
      %v754 = vsel %vm690, %v642, %v722
      %v755 = vsel %vm691, %v645, %v723
      %v756 = vsel %vm692, %v650, %v724
      %v757 = vsel %vm693, %v653, %v725
      %v758 = vsel %vm694, %v658, %v726
      %v759 = vsel %vm695, %v661, %v727
      %v760 = vpack.c.bf16 %v729, %v728
      %v761 = vpack.c.bf16 %v731, %v730
      %v762 = vpack.c.bf16 %v733, %v732
      %v763 = vpack.c.bf16 %v735, %v734
      %v764 = vpack.c.bf16 %v737, %v736
      %v765 = vpack.c.bf16 %v739, %v738
      %v766 = vpack.c.bf16 %v741, %v740
      %v767 = vpack.c.bf16 %v743, %v742
      %v768 = vpack.c.bf16 %v745, %v744
      %v769 = vpack.c.bf16 %v747, %v746
      %v770 = vpack.c.bf16 %v749, %v748
      %v771 = vpack.c.bf16 %v751, %v750
      %v772 = vpack.c.bf16 %v753, %v752
      %v773 = vpack.c.bf16 %v755, %v754
      %v774 = vpack.c.bf16 %v757, %v756
      %v775 = vpack.c.bf16 %v759, %v758
      %v776 = vld [vmem:[%s4] sm:$0xf]
      %v777 = vld [vmem:[%s4 + $0x4] sm:$0xf]
      %v778 = vld [vmem:[%s4 + $0x8] sm:$0xf]
      %v779 = vld [vmem:[%s4 + $0xc] sm:$0xf]
      %v780 = vld [vmem:[%s5] sm:$0x1]
      %v782 = vlaneseq
      %v783 = vshrl.u32 %v782, 7
      %v784 = vsub.s32 0, %v783
      %v785 = vrot.slane %v780, %v784
      %v791 = vunpack.c.l.b16 %v776
      %v792 = vunpack.c.l.b16 %v777
      %v793 = vunpack.c.l.b16 %v778
      %v794 = vunpack.c.l.b16 %v779
      %v795 = vpack.c.b16 %v792, %v791
      %v796 = vpack.c.b16 %v794, %v793
      %vm799 = vcmask 261120
      %v801 = vsel %vm799, %v760, 0
      %v804 = vsel %vm799, %v761, 0
      %v807 = vsel %vm799, %v762, 0
      %v810 = vsel %vm799, %v763, 0
      %v813 = vsel %vm799, %v764, 0
      %v816 = vsel %vm799, %v765, 0
      %v819 = vsel %vm799, %v766, 0
      %v822 = vsel %vm799, %v767, 0
      %v825 = vsel %vm799, %v768, 0
      %v828 = vsel %vm799, %v769, 0
      %v831 = vsel %vm799, %v770, 0
      %v834 = vsel %vm799, %v771, 0
      %v837 = vsel %vm799, %v772, 0
      %v840 = vsel %vm799, %v773, 0
      %v843 = vsel %vm799, %v774, 0
      %v846 = vsel %vm799, %v775, 0
      %848 = vmatprep.subr.bf16.mxu0 0
      %849 = vmatpush1.bf16.msra.mxu0 %v795
      %850 = vmatprep.subr.bf16.mxu0 0
      %851 = vmatpush1.bf16.msra.mxu0 %v796
      %852 = vmatprep.subr.bf16.mxu0 0
      %853 = vmatpush1.bf16.msra.mxu0 0
      %854 = vmatprep.subr.bf16.mxu0 0
      %855 = vmatpush1.bf16.msra.mxu0 0
      %856 = vmatprep.subr.bf16.mxu0 0
      %857 = vmatpush1.bf16.msra.mxu0 0
      %858 = vmatprep.subr.bf16.mxu0 0
      %859 = vmatpush1.bf16.msra.mxu0 0
      %860 = vmatprep.subr.bf16.mxu0 0
      %861 = vmatpush1.bf16.msra.mxu0 0
      %862 = vmatprep.subr.bf16.mxu0 0
      %863 = vmatpush1.bf16.msra.mxu0 0
      %864 = vmatprep.subr.bf16.mxu0 0
      %865 = vmatpush1.bf16.msra.mxu0 0
      %866 = vmatprep.subr.bf16.mxu0 0
      %867 = vmatpush1.bf16.msra.mxu0 0
      %868 = vmatprep.subr.bf16.mxu0 0
      %869 = vmatpush1.bf16.msra.mxu0 0
      %870 = vmatprep.subr.bf16.mxu0 0
      %871 = vmatpush1.bf16.msra.mxu0 0
      %872 = vmatprep.subr.bf16.mxu0 0
      %873 = vmatpush1.bf16.msra.mxu0 0
      %874 = vmatprep.subr.bf16.mxu0 0
      %875 = vmatpush1.bf16.msra.mxu0 0
      %876 = vmatprep.subr.bf16.mxu0 0
      %877 = vmatpush1.bf16.msra.mxu0 0
      %878 = vmatprep.subr.bf16.mxu0 0
      %879 = vmatpush1.bf16.msra.mxu0 0
      %880 = vmatprep.mubr.bf16.mxu0 0
      %881 = vmatmul.mubr.bf16.gmra.mrb[0].mxu0 %v801
      %v882 = vpop.f32.mrb[0].mxu0
      %v883 = vadd.f32 %v785, %v882
      %v884 = vpop.f32.mrb[0].mxu0
      %v885 = vpop.f32.mrb[0].mxu0
      %v886 = vadd.f32 %v785, %v885
      %v887 = vpop.f32.mrb[0].mxu0
      %888 = vmatprep.mubr.bf16.mxu0 0
      %889 = vmatmul.mubr.bf16.gmra.mrb[0].mxu0 %v804
      %v890 = vpop.f32.mrb[0].mxu0
      %v891 = vadd.f32 %v785, %v890
      %v892 = vpop.f32.mrb[0].mxu0
      %v893 = vpop.f32.mrb[0].mxu0
      %v894 = vadd.f32 %v785, %v893
      %v895 = vpop.f32.mrb[0].mxu0
      %896 = vmatprep.mubr.bf16.mxu0 0
      %897 = vmatmul.mubr.bf16.gmra.mrb[0].mxu0 %v807
      %v898 = vpop.f32.mrb[0].mxu0
      %v899 = vadd.f32 %v785, %v898
      %v900 = vpop.f32.mrb[0].mxu0
      %v901 = vpop.f32.mrb[0].mxu0
      %v902 = vadd.f32 %v785, %v901
      %v903 = vpop.f32.mrb[0].mxu0
      %904 = vmatprep.mubr.bf16.mxu0 0
      %905 = vmatmul.mubr.bf16.gmra.mrb[0].mxu0 %v810
      %v906 = vpop.f32.mrb[0].mxu0
      %v907 = vadd.f32 %v785, %v906
      %v908 = vpop.f32.mrb[0].mxu0
      %v909 = vpop.f32.mrb[0].mxu0
      %v910 = vadd.f32 %v785, %v909
      %v911 = vpop.f32.mrb[0].mxu0
      %912 = vmatprep.mubr.bf16.mxu0 0
      %913 = vmatmul.mubr.bf16.gmra.mrb[0].mxu0 %v813
      %v914 = vpop.f32.mrb[0].mxu0
      %v915 = vadd.f32 %v785, %v914
      %v916 = vpop.f32.mrb[0].mxu0
      %v917 = vpop.f32.mrb[0].mxu0
      %v918 = vadd.f32 %v785, %v917
      %v919 = vpop.f32.mrb[0].mxu0
      %920 = vmatprep.mubr.bf16.mxu0 0
      %921 = vmatmul.mubr.bf16.gmra.mrb[0].mxu0 %v816
      %v922 = vpop.f32.mrb[0].mxu0
      %v923 = vadd.f32 %v785, %v922
      %v924 = vpop.f32.mrb[0].mxu0
      %v925 = vpop.f32.mrb[0].mxu0
      %v926 = vadd.f32 %v785, %v925
      %v927 = vpop.f32.mrb[0].mxu0
      %928 = vmatprep.mubr.bf16.mxu0 0
      %929 = vmatmul.mubr.bf16.gmra.mrb[0].mxu0 %v819
      %v930 = vpop.f32.mrb[0].mxu0
      %v931 = vadd.f32 %v785, %v930
      %v932 = vpop.f32.mrb[0].mxu0
      %v933 = vpop.f32.mrb[0].mxu0
      %v934 = vadd.f32 %v785, %v933
      %v935 = vpop.f32.mrb[0].mxu0
      %936 = vmatprep.mubr.bf16.mxu0 0
      %937 = vmatmul.mubr.bf16.gmra.mrb[0].mxu0 %v822
      %v938 = vpop.f32.mrb[0].mxu0
      %v939 = vadd.f32 %v785, %v938
      %v940 = vpop.f32.mrb[0].mxu0
      %v941 = vpop.f32.mrb[0].mxu0
      %v942 = vadd.f32 %v785, %v941
      %v943 = vpop.f32.mrb[0].mxu0
      %944 = vmatprep.mubr.bf16.mxu0 0
      %945 = vmatmul.mubr.bf16.gmra.mrb[0].mxu0 %v825
      %v946 = vpop.f32.mrb[0].mxu0
      %v947 = vadd.f32 %v785, %v946
      %v948 = vpop.f32.mrb[0].mxu0
      %v949 = vpop.f32.mrb[0].mxu0
      %v950 = vadd.f32 %v785, %v949
      %v951 = vpop.f32.mrb[0].mxu0
      %952 = vmatprep.mubr.bf16.mxu0 0
      %953 = vmatmul.mubr.bf16.gmra.mrb[0].mxu0 %v828
      %v954 = vpop.f32.mrb[0].mxu0
      %v955 = vadd.f32 %v785, %v954
      %v956 = vpop.f32.mrb[0].mxu0
      %v957 = vpop.f32.mrb[0].mxu0
      %v958 = vadd.f32 %v785, %v957
      %v959 = vpop.f32.mrb[0].mxu0
      %960 = vmatprep.mubr.bf16.mxu0 0
      %961 = vmatmul.mubr.bf16.gmra.mrb[0].mxu0 %v831
      %v962 = vpop.f32.mrb[0].mxu0
      %v963 = vadd.f32 %v785, %v962
      %v964 = vpop.f32.mrb[0].mxu0
      %v965 = vpop.f32.mrb[0].mxu0
      %v966 = vadd.f32 %v785, %v965
      %v967 = vpop.f32.mrb[0].mxu0
      %968 = vmatprep.mubr.bf16.mxu0 0
      %969 = vmatmul.mubr.bf16.gmra.mrb[0].mxu0 %v834
      %v970 = vpop.f32.mrb[0].mxu0
      %v971 = vadd.f32 %v785, %v970
      %v972 = vpop.f32.mrb[0].mxu0
      %v973 = vpop.f32.mrb[0].mxu0
      %v974 = vadd.f32 %v785, %v973
      %v975 = vpop.f32.mrb[0].mxu0
      %976 = vmatprep.mubr.bf16.mxu0 0
      %977 = vmatmul.mubr.bf16.gmra.mrb[0].mxu0 %v837
      %v978 = vpop.f32.mrb[0].mxu0
      %v979 = vadd.f32 %v785, %v978
      %v980 = vpop.f32.mrb[0].mxu0
      %v981 = vpop.f32.mrb[0].mxu0
      %v982 = vadd.f32 %v785, %v981
      %v983 = vpop.f32.mrb[0].mxu0
      %984 = vmatprep.mubr.bf16.mxu0 0
      %985 = vmatmul.mubr.bf16.gmra.mrb[0].mxu0 %v840
      %v986 = vpop.f32.mrb[0].mxu0
      %v987 = vadd.f32 %v785, %v986
      %v988 = vpop.f32.mrb[0].mxu0
      %v989 = vpop.f32.mrb[0].mxu0
      %v990 = vadd.f32 %v785, %v989
      %v991 = vpop.f32.mrb[0].mxu0
      %992 = vmatprep.mubr.bf16.mxu0 0
      %993 = vmatmul.mubr.bf16.gmra.mrb[0].mxu0 %v843
      %v994 = vpop.f32.mrb[0].mxu0
      %v995 = vadd.f32 %v785, %v994
      %v996 = vpop.f32.mrb[0].mxu0
      %v997 = vpop.f32.mrb[0].mxu0
      %v998 = vadd.f32 %v785, %v997
      %v999 = vpop.f32.mrb[0].mxu0
      %1000 = vmatprep.mubr.bf16.mxu0 0
      %1001 = vmatmul.mubr.bf16.gmra.mrb[0].mxu0 %v846
      %v1002 = vpop.f32.mrb[0].mxu0
      %v1003 = vadd.f32 %v785, %v1002
      %v1004 = vpop.f32.mrb[0].mxu0
      %v1005 = vpop.f32.mrb[0].mxu0
      %v1006 = vadd.f32 %v785, %v1005
      %v1007 = vpop.f32.mrb[0].mxu0
      %1008 = vdwg.mxu0
      %vm1009 = vcmp.gt.f32.partialorder %v883, 0.0
      %vm1010 = vcmp.gt.f32.partialorder %v886, 0.0
      %vm1011 = vcmp.gt.f32.partialorder %v891, 0.0
      %vm1012 = vcmp.gt.f32.partialorder %v894, 0.0
      %vm1013 = vcmp.gt.f32.partialorder %v899, 0.0
      %vm1014 = vcmp.gt.f32.partialorder %v902, 0.0
      %vm1015 = vcmp.gt.f32.partialorder %v907, 0.0
      %vm1016 = vcmp.gt.f32.partialorder %v910, 0.0
      %vm1017 = vcmp.gt.f32.partialorder %v915, 0.0
      %vm1018 = vcmp.gt.f32.partialorder %v918, 0.0
      %vm1019 = vcmp.gt.f32.partialorder %v923, 0.0
      %vm1020 = vcmp.gt.f32.partialorder %v926, 0.0
      %vm1021 = vcmp.gt.f32.partialorder %v931, 0.0
      %vm1022 = vcmp.gt.f32.partialorder %v934, 0.0
      %vm1023 = vcmp.gt.f32.partialorder %v939, 0.0
      %vm1024 = vcmp.gt.f32.partialorder %v942, 0.0
      %vm1025 = vcmp.gt.f32.partialorder %v947, 0.0
      %vm1026 = vcmp.gt.f32.partialorder %v950, 0.0
      %vm1027 = vcmp.gt.f32.partialorder %v955, 0.0
      %vm1028 = vcmp.gt.f32.partialorder %v958, 0.0
      %vm1029 = vcmp.gt.f32.partialorder %v963, 0.0
      %vm1030 = vcmp.gt.f32.partialorder %v966, 0.0
      %vm1031 = vcmp.gt.f32.partialorder %v971, 0.0
      %vm1032 = vcmp.gt.f32.partialorder %v974, 0.0
      %vm1033 = vcmp.gt.f32.partialorder %v979, 0.0
      %vm1034 = vcmp.gt.f32.partialorder %v982, 0.0
      %vm1035 = vcmp.gt.f32.partialorder %v987, 0.0
      %vm1036 = vcmp.gt.f32.partialorder %v990, 0.0
      %vm1037 = vcmp.gt.f32.partialorder %v995, 0.0
      %vm1038 = vcmp.gt.f32.partialorder %v998, 0.0
      %vm1039 = vcmp.gt.f32.partialorder %v1003, 0.0
      %vm1040 = vcmp.gt.f32.partialorder %v1006, 0.0
      %v1041 = vmul.f32 %v883, 0.01
      %v1042 = vmul.f32 %v886, 0.01
      %v1043 = vmul.f32 %v891, 0.01
      %v1044 = vmul.f32 %v894, 0.01
      %v1045 = vmul.f32 %v899, 0.01
      %v1046 = vmul.f32 %v902, 0.01
      %v1047 = vmul.f32 %v907, 0.01
      %v1048 = vmul.f32 %v910, 0.01
      %v1049 = vmul.f32 %v915, 0.01
      %v1050 = vmul.f32 %v918, 0.01
      %v1051 = vmul.f32 %v923, 0.01
      %v1052 = vmul.f32 %v926, 0.01
      %v1053 = vmul.f32 %v931, 0.01
      %v1054 = vmul.f32 %v934, 0.01
      %v1055 = vmul.f32 %v939, 0.01
      %v1056 = vmul.f32 %v942, 0.01
      %v1057 = vmul.f32 %v947, 0.01
      %v1058 = vmul.f32 %v950, 0.01
      %v1059 = vmul.f32 %v955, 0.01
      %v1060 = vmul.f32 %v958, 0.01
      %v1061 = vmul.f32 %v963, 0.01
      %v1062 = vmul.f32 %v966, 0.01
      %v1063 = vmul.f32 %v971, 0.01
      %v1064 = vmul.f32 %v974, 0.01
      %v1065 = vmul.f32 %v979, 0.01
      %v1066 = vmul.f32 %v982, 0.01
      %v1067 = vmul.f32 %v987, 0.01
      %v1068 = vmul.f32 %v990, 0.01
      %v1069 = vmul.f32 %v995, 0.01
      %v1070 = vmul.f32 %v998, 0.01
      %v1071 = vmul.f32 %v1003, 0.01
      %v1072 = vmul.f32 %v1006, 0.01
      %v1073 = vsel %vm1009, %v883, %v1041
      %v1074 = vsel %vm1010, %v886, %v1042
      %v1075 = vsel %vm1011, %v891, %v1043
      %v1076 = vsel %vm1012, %v894, %v1044
      %v1077 = vsel %vm1013, %v899, %v1045
      %v1078 = vsel %vm1014, %v902, %v1046
      %v1079 = vsel %vm1015, %v907, %v1047
      %v1080 = vsel %vm1016, %v910, %v1048
      %v1081 = vsel %vm1017, %v915, %v1049
      %v1082 = vsel %vm1018, %v918, %v1050
      %v1083 = vsel %vm1019, %v923, %v1051
      %v1084 = vsel %vm1020, %v926, %v1052
      %v1085 = vsel %vm1021, %v931, %v1053
      %v1086 = vsel %vm1022, %v934, %v1054
      %v1087 = vsel %vm1023, %v939, %v1055
      %v1088 = vsel %vm1024, %v942, %v1056
      %v1089 = vsel %vm1025, %v947, %v1057
      %v1090 = vsel %vm1026, %v950, %v1058
      %v1091 = vsel %vm1027, %v955, %v1059
      %v1092 = vsel %vm1028, %v958, %v1060
      %v1093 = vsel %vm1029, %v963, %v1061
      %v1094 = vsel %vm1030, %v966, %v1062
      %v1095 = vsel %vm1031, %v971, %v1063
      %v1096 = vsel %vm1032, %v974, %v1064
      %v1097 = vsel %vm1033, %v979, %v1065
      %v1098 = vsel %vm1034, %v982, %v1066
      %v1099 = vsel %vm1035, %v987, %v1067
      %v1100 = vsel %vm1036, %v990, %v1068
      %v1101 = vsel %vm1037, %v995, %v1069
      %v1102 = vsel %vm1038, %v998, %v1070
      %v1103 = vsel %vm1039, %v1003, %v1071
      %v1104 = vsel %vm1040, %v1006, %v1072
      %v1105 = vpack.c.bf16 %v1074, %v1073
      %v1106 = vpack.c.bf16 %v1076, %v1075
      %v1107 = vpack.c.bf16 %v1078, %v1077
      %v1108 = vpack.c.bf16 %v1080, %v1079
      %v1109 = vpack.c.bf16 %v1082, %v1081
      %v1110 = vpack.c.bf16 %v1084, %v1083
      %v1111 = vpack.c.bf16 %v1086, %v1085
      %v1112 = vpack.c.bf16 %v1088, %v1087
      %v1113 = vpack.c.bf16 %v1090, %v1089
      %v1114 = vpack.c.bf16 %v1092, %v1091
      %v1115 = vpack.c.bf16 %v1094, %v1093
      %v1116 = vpack.c.bf16 %v1096, %v1095
      %v1117 = vpack.c.bf16 %v1098, %v1097
      %v1118 = vpack.c.bf16 %v1100, %v1099
      %v1119 = vpack.c.bf16 %v1102, %v1101
      %v1120 = vpack.c.bf16 %v1104, %v1103
      %v1121 = vld [vmem:[%s6] sm:$0xf]
      %v1122 = vld [vmem:[%s6 + $0x4] sm:$0xf]
      %v1123 = vld [vmem:[%s6 + $0x8] sm:$0xf]
      %v1124 = vld [vmem:[%s6 + $0xc] sm:$0xf]
      %v1125 = vld [vmem:[%s7] sm:$0x1]
      %v1127 = vlaneseq
      %v1128 = vshrl.u32 %v1127, 7
      %v1129 = vsub.s32 0, %v1128
      %v1130 = vrot.slane %v1125, %v1129
      %v1136 = vunpack.c.l.b16 %v1121
      %v1137 = vunpack.c.l.b16 %v1122
      %v1138 = vunpack.c.l.b16 %v1123
      %v1139 = vunpack.c.l.b16 %v1124
      %v1140 = vpack.c.b16 %v1137, %v1136
      %v1141 = vpack.c.b16 %v1139, %v1138
      %v1145 = vsel %vm799, %v1105, 0
      %v1148 = vsel %vm799, %v1106, 0
      %v1151 = vsel %vm799, %v1107, 0
      %v1154 = vsel %vm799, %v1108, 0
      %v1157 = vsel %vm799, %v1109, 0
      %v1160 = vsel %vm799, %v1110, 0
      %v1163 = vsel %vm799, %v1111, 0
      %v1166 = vsel %vm799, %v1112, 0
      %v1169 = vsel %vm799, %v1113, 0
      %v1172 = vsel %vm799, %v1114, 0
      %v1175 = vsel %vm799, %v1115, 0
      %v1178 = vsel %vm799, %v1116, 0
      %v1181 = vsel %vm799, %v1117, 0
      %v1184 = vsel %vm799, %v1118, 0
      %v1187 = vsel %vm799, %v1119, 0
      %v1190 = vsel %vm799, %v1120, 0
      %1192 = vmatprep.subr.bf16.mxu0 0
      %1193 = vmatpush1.bf16.msra.mxu0 %v1140
      %1194 = vmatprep.subr.bf16.mxu0 0
      %1195 = vmatpush1.bf16.msra.mxu0 %v1141
      %1196 = vmatprep.subr.bf16.mxu0 0
      %1197 = vmatpush1.bf16.msra.mxu0 0
      %1198 = vmatprep.subr.bf16.mxu0 0
      %1199 = vmatpush1.bf16.msra.mxu0 0
      %1200 = vmatprep.subr.bf16.mxu0 0
      %1201 = vmatpush1.bf16.msra.mxu0 0
      %1202 = vmatprep.subr.bf16.mxu0 0
      %1203 = vmatpush1.bf16.msra.mxu0 0
      %1204 = vmatprep.subr.bf16.mxu0 0
      %1205 = vmatpush1.bf16.msra.mxu0 0
      %1206 = vmatprep.subr.bf16.mxu0 0
      %1207 = vmatpush1.bf16.msra.mxu0 0
      %1208 = vmatprep.subr.bf16.mxu0 0
      %1209 = vmatpush1.bf16.msra.mxu0 0
      %1210 = vmatprep.subr.bf16.mxu0 0
      %1211 = vmatpush1.bf16.msra.mxu0 0
      %1212 = vmatprep.subr.bf16.mxu0 0
      %1213 = vmatpush1.bf16.msra.mxu0 0
      %1214 = vmatprep.subr.bf16.mxu0 0
      %1215 = vmatpush1.bf16.msra.mxu0 0
      %1216 = vmatprep.subr.bf16.mxu0 0
      %1217 = vmatpush1.bf16.msra.mxu0 0
      %1218 = vmatprep.subr.bf16.mxu0 0
      %1219 = vmatpush1.bf16.msra.mxu0 0
      %1220 = vmatprep.subr.bf16.mxu0 0
      %1221 = vmatpush1.bf16.msra.mxu0 0
      %1222 = vmatprep.subr.bf16.mxu0 0
      %1223 = vmatpush1.bf16.msra.mxu0 0
      %1224 = vmatprep.mubr.bf16.mxu0 0
      %1225 = vmatmul.mubr.bf16.gmra.mrb[0].mxu0 %v1145
      %v1226 = vpop.f32.mrb[0].mxu0
      %v1227 = vadd.f32 %v1130, %v1226
      %v1228 = vpop.f32.mrb[0].mxu0
      %v1229 = vpop.f32.mrb[0].mxu0
      %v1230 = vadd.f32 %v1130, %v1229
      %v1231 = vpop.f32.mrb[0].mxu0
      %1232 = vmatprep.mubr.bf16.mxu0 0
      %1233 = vmatmul.mubr.bf16.gmra.mrb[0].mxu0 %v1148
      %v1234 = vpop.f32.mrb[0].mxu0
      %v1235 = vadd.f32 %v1130, %v1234
      %v1236 = vpop.f32.mrb[0].mxu0
      %v1237 = vpop.f32.mrb[0].mxu0
      %v1238 = vadd.f32 %v1130, %v1237
      %v1239 = vpop.f32.mrb[0].mxu0
      %1240 = vmatprep.mubr.bf16.mxu0 0
      %1241 = vmatmul.mubr.bf16.gmra.mrb[0].mxu0 %v1151
      %v1242 = vpop.f32.mrb[0].mxu0
      %v1243 = vadd.f32 %v1130, %v1242
      %v1244 = vpop.f32.mrb[0].mxu0
      %v1245 = vpop.f32.mrb[0].mxu0
      %v1246 = vadd.f32 %v1130, %v1245
      %v1247 = vpop.f32.mrb[0].mxu0
      %1248 = vmatprep.mubr.bf16.mxu0 0
      %1249 = vmatmul.mubr.bf16.gmra.mrb[0].mxu0 %v1154
      %v1250 = vpop.f32.mrb[0].mxu0
      %v1251 = vadd.f32 %v1130, %v1250
      %v1252 = vpop.f32.mrb[0].mxu0
      %v1253 = vpop.f32.mrb[0].mxu0
      %v1254 = vadd.f32 %v1130, %v1253
      %v1255 = vpop.f32.mrb[0].mxu0
      %1256 = vmatprep.mubr.bf16.mxu0 0
      %1257 = vmatmul.mubr.bf16.gmra.mrb[0].mxu0 %v1157
      %v1258 = vpop.f32.mrb[0].mxu0
      %v1259 = vadd.f32 %v1130, %v1258
      %v1260 = vpop.f32.mrb[0].mxu0
      %v1261 = vpop.f32.mrb[0].mxu0
      %v1262 = vadd.f32 %v1130, %v1261
      %v1263 = vpop.f32.mrb[0].mxu0
      %1264 = vmatprep.mubr.bf16.mxu0 0
      %1265 = vmatmul.mubr.bf16.gmra.mrb[0].mxu0 %v1160
      %v1266 = vpop.f32.mrb[0].mxu0
      %v1267 = vadd.f32 %v1130, %v1266
      %v1268 = vpop.f32.mrb[0].mxu0
      %v1269 = vpop.f32.mrb[0].mxu0
      %v1270 = vadd.f32 %v1130, %v1269
      %v1271 = vpop.f32.mrb[0].mxu0
      %1272 = vmatprep.mubr.bf16.mxu0 0
      %1273 = vmatmul.mubr.bf16.gmra.mrb[0].mxu0 %v1163
      %v1274 = vpop.f32.mrb[0].mxu0
      %v1275 = vadd.f32 %v1130, %v1274
      %v1276 = vpop.f32.mrb[0].mxu0
      %v1277 = vpop.f32.mrb[0].mxu0
      %v1278 = vadd.f32 %v1130, %v1277
      %v1279 = vpop.f32.mrb[0].mxu0
      %1280 = vmatprep.mubr.bf16.mxu0 0
      %1281 = vmatmul.mubr.bf16.gmra.mrb[0].mxu0 %v1166
      %v1282 = vpop.f32.mrb[0].mxu0
      %v1283 = vadd.f32 %v1130, %v1282
      %v1284 = vpop.f32.mrb[0].mxu0
      %v1285 = vpop.f32.mrb[0].mxu0
      %v1286 = vadd.f32 %v1130, %v1285
      %v1287 = vpop.f32.mrb[0].mxu0
      %1288 = vmatprep.mubr.bf16.mxu0 0
      %1289 = vmatmul.mubr.bf16.gmra.mrb[0].mxu0 %v1169
      %v1290 = vpop.f32.mrb[0].mxu0
      %v1291 = vadd.f32 %v1130, %v1290
      %v1292 = vpop.f32.mrb[0].mxu0
      %v1293 = vpop.f32.mrb[0].mxu0
      %v1294 = vadd.f32 %v1130, %v1293
      %v1295 = vpop.f32.mrb[0].mxu0
      %1296 = vmatprep.mubr.bf16.mxu0 0
      %1297 = vmatmul.mubr.bf16.gmra.mrb[0].mxu0 %v1172
      %v1298 = vpop.f32.mrb[0].mxu0
      %v1299 = vadd.f32 %v1130, %v1298
      %v1300 = vpop.f32.mrb[0].mxu0
      %v1301 = vpop.f32.mrb[0].mxu0
      %v1302 = vadd.f32 %v1130, %v1301
      %v1303 = vpop.f32.mrb[0].mxu0
      %1304 = vmatprep.mubr.bf16.mxu0 0
      %1305 = vmatmul.mubr.bf16.gmra.mrb[0].mxu0 %v1175
      %v1306 = vpop.f32.mrb[0].mxu0
      %v1307 = vadd.f32 %v1130, %v1306
      %v1308 = vpop.f32.mrb[0].mxu0
      %v1309 = vpop.f32.mrb[0].mxu0
      %v1310 = vadd.f32 %v1130, %v1309
      %v1311 = vpop.f32.mrb[0].mxu0
      %1312 = vmatprep.mubr.bf16.mxu0 0
      %1313 = vmatmul.mubr.bf16.gmra.mrb[0].mxu0 %v1178
      %v1314 = vpop.f32.mrb[0].mxu0
      %v1315 = vadd.f32 %v1130, %v1314
      %v1316 = vpop.f32.mrb[0].mxu0
      %v1317 = vpop.f32.mrb[0].mxu0
      %v1318 = vadd.f32 %v1130, %v1317
      %v1319 = vpop.f32.mrb[0].mxu0
      %1320 = vmatprep.mubr.bf16.mxu0 0
      %1321 = vmatmul.mubr.bf16.gmra.mrb[0].mxu0 %v1181
      %v1322 = vpop.f32.mrb[0].mxu0
      %v1323 = vadd.f32 %v1130, %v1322
      %v1324 = vpop.f32.mrb[0].mxu0
      %v1325 = vpop.f32.mrb[0].mxu0
      %v1326 = vadd.f32 %v1130, %v1325
      %v1327 = vpop.f32.mrb[0].mxu0
      %1328 = vmatprep.mubr.bf16.mxu0 0
      %1329 = vmatmul.mubr.bf16.gmra.mrb[0].mxu0 %v1184
      %v1330 = vpop.f32.mrb[0].mxu0
      %v1331 = vadd.f32 %v1130, %v1330
      %v1332 = vpop.f32.mrb[0].mxu0
      %v1333 = vpop.f32.mrb[0].mxu0
      %v1334 = vadd.f32 %v1130, %v1333
      %v1335 = vpop.f32.mrb[0].mxu0
      %1336 = vmatprep.mubr.bf16.mxu0 0
      %1337 = vmatmul.mubr.bf16.gmra.mrb[0].mxu0 %v1187
      %v1338 = vpop.f32.mrb[0].mxu0
      %v1339 = vadd.f32 %v1130, %v1338
      %v1340 = vpop.f32.mrb[0].mxu0
      %v1341 = vpop.f32.mrb[0].mxu0
      %v1342 = vadd.f32 %v1130, %v1341
      %v1343 = vpop.f32.mrb[0].mxu0
      %1344 = vmatprep.mubr.bf16.mxu0 0
      %1345 = vmatmul.mubr.bf16.gmra.mrb[0].mxu0 %v1190
      %v1346 = vpop.f32.mrb[0].mxu0
      %v1347 = vadd.f32 %v1130, %v1346
      %v1348 = vpop.f32.mrb[0].mxu0
      %v1349 = vpop.f32.mrb[0].mxu0
      %v1350 = vadd.f32 %v1130, %v1349
      %v1351 = vpop.f32.mrb[0].mxu0
      %1352 = vdwg.mxu0
      %v1353 = vtanh.pop %v1227
      %v1354 = vtanh.pop %v1230
      %v1355 = vtanh.pop %v1235
      %v1356 = vtanh.pop %v1238
      %v1357 = vtanh.pop %v1243
      %v1358 = vtanh.pop %v1246
      %v1359 = vtanh.pop %v1251
      %v1360 = vtanh.pop %v1254
      %v1361 = vtanh.pop %v1259
      %v1362 = vtanh.pop %v1262
      %v1363 = vtanh.pop %v1267
      %v1364 = vtanh.pop %v1270
      %v1365 = vtanh.pop %v1275
      %v1366 = vtanh.pop %v1278
      %v1367 = vtanh.pop %v1283
      %v1368 = vtanh.pop %v1286
      %v1369 = vtanh.pop %v1291
      %v1370 = vtanh.pop %v1294
      %v1371 = vtanh.pop %v1299
      %v1372 = vtanh.pop %v1302
      %v1373 = vtanh.pop %v1307
      %v1374 = vtanh.pop %v1310
      %v1375 = vtanh.pop %v1315
      %v1376 = vtanh.pop %v1318
      %v1377 = vtanh.pop %v1323
      %v1378 = vtanh.pop %v1326
      %v1379 = vtanh.pop %v1331
      %v1380 = vtanh.pop %v1334
      %v1381 = vtanh.pop %v1339
      %v1382 = vtanh.pop %v1342
      %v1383 = vtanh.pop %v1347
      %v1384 = vtanh.pop %v1350
      %v1386 = vlaneseq
      %v1387 = vshrl.u32 %v1386, 7
      %v1388 = vsub.s32 0, %v1387
      %v1389 = vrot.slane %v384, %v1388
      %v1391 = vmul.f32 %v1389, %v1353
      %v1392 = vmul.f32 %v1389, %v1354
      %v1393 = vmul.f32 %v1389, %v1355
      %v1394 = vmul.f32 %v1389, %v1356
      %v1395 = vmul.f32 %v1389, %v1357
      %v1396 = vmul.f32 %v1389, %v1358
      %v1397 = vmul.f32 %v1389, %v1359
      %v1398 = vmul.f32 %v1389, %v1360
      %v1399 = vmul.f32 %v1389, %v1361
      %v1400 = vmul.f32 %v1389, %v1362
      %v1401 = vmul.f32 %v1389, %v1363
      %v1402 = vmul.f32 %v1389, %v1364
      %v1403 = vmul.f32 %v1389, %v1365
      %v1404 = vmul.f32 %v1389, %v1366
      %v1405 = vmul.f32 %v1389, %v1367
      %v1406 = vmul.f32 %v1389, %v1368
      %v1407 = vmul.f32 %v1389, %v1369
      %v1408 = vmul.f32 %v1389, %v1370
      %v1409 = vmul.f32 %v1389, %v1371
      %v1410 = vmul.f32 %v1389, %v1372
      %v1411 = vmul.f32 %v1389, %v1373
      %v1412 = vmul.f32 %v1389, %v1374
      %v1413 = vmul.f32 %v1389, %v1375
      %v1414 = vmul.f32 %v1389, %v1376
      %v1415 = vmul.f32 %v1389, %v1377
      %v1416 = vmul.f32 %v1389, %v1378
      %v1417 = vmul.f32 %v1389, %v1379
      %v1418 = vmul.f32 %v1389, %v1380
      %v1419 = vmul.f32 %v1389, %v1381
      %v1420 = vmul.f32 %v1389, %v1382
      %v1421 = vmul.f32 %v1389, %v1383
      %v1422 = vmul.f32 %v1389, %v1384
      %1455 = vrot.lane.b32.xlu0 %v1227, 112
      %v1456 = vpop.permute.xlu0 %1455
      %1457 = vrot.lane.b32.xlu0 %v1230, 112
      %v1458 = vpop.permute.xlu0 %1457
      %1459 = vrot.lane.b32.xlu0 %v1235, 112
      %v1460 = vpop.permute.xlu0 %1459
      %1461 = vrot.lane.b32.xlu0 %v1238, 112
      %v1462 = vpop.permute.xlu0 %1461
      %1463 = vrot.lane.b32.xlu0 %v1243, 112
      %v1464 = vpop.permute.xlu0 %1463
      %1465 = vrot.lane.b32.xlu0 %v1246, 112
      %v1466 = vpop.permute.xlu0 %1465
      %1467 = vrot.lane.b32.xlu0 %v1251, 112
      %v1468 = vpop.permute.xlu0 %1467
      %1469 = vrot.lane.b32.xlu0 %v1254, 112
      %v1470 = vpop.permute.xlu0 %1469
      %1471 = vrot.lane.b32.xlu0 %v1259, 112
      %v1472 = vpop.permute.xlu0 %1471
      %1473 = vrot.lane.b32.xlu0 %v1262, 112
      %v1474 = vpop.permute.xlu0 %1473
      %1475 = vrot.lane.b32.xlu0 %v1267, 112
      %v1476 = vpop.permute.xlu0 %1475
      %1477 = vrot.lane.b32.xlu0 %v1270, 112
      %v1478 = vpop.permute.xlu0 %1477
      %1479 = vrot.lane.b32.xlu0 %v1275, 112
      %v1480 = vpop.permute.xlu0 %1479
      %1481 = vrot.lane.b32.xlu0 %v1278, 112
      %v1482 = vpop.permute.xlu0 %1481
      %1483 = vrot.lane.b32.xlu0 %v1283, 112
      %v1484 = vpop.permute.xlu0 %1483
      %1485 = vrot.lane.b32.xlu0 %v1286, 112
      %v1486 = vpop.permute.xlu0 %1485
      %1487 = vrot.lane.b32.xlu0 %v1291, 112
      %v1488 = vpop.permute.xlu0 %1487
      %1489 = vrot.lane.b32.xlu0 %v1294, 112
      %v1490 = vpop.permute.xlu0 %1489
      %1491 = vrot.lane.b32.xlu0 %v1299, 112
      %v1492 = vpop.permute.xlu0 %1491
      %1493 = vrot.lane.b32.xlu0 %v1302, 112
      %v1494 = vpop.permute.xlu0 %1493
      %1495 = vrot.lane.b32.xlu0 %v1307, 112
      %v1496 = vpop.permute.xlu0 %1495
      %1497 = vrot.lane.b32.xlu0 %v1310, 112
      %v1498 = vpop.permute.xlu0 %1497
      %1499 = vrot.lane.b32.xlu0 %v1315, 112
      %v1500 = vpop.permute.xlu0 %1499
      %1501 = vrot.lane.b32.xlu0 %v1318, 112
      %v1502 = vpop.permute.xlu0 %1501
      %1503 = vrot.lane.b32.xlu0 %v1323, 112
      %v1504 = vpop.permute.xlu0 %1503
      %1505 = vrot.lane.b32.xlu0 %v1326, 112
      %v1506 = vpop.permute.xlu0 %1505
      %1507 = vrot.lane.b32.xlu0 %v1331, 112
      %v1508 = vpop.permute.xlu0 %1507
      %1509 = vrot.lane.b32.xlu0 %v1334, 112
      %v1510 = vpop.permute.xlu0 %1509
      %1511 = vrot.lane.b32.xlu0 %v1339, 112
      %v1512 = vpop.permute.xlu0 %1511
      %1513 = vrot.lane.b32.xlu0 %v1342, 112
      %v1514 = vpop.permute.xlu0 %1513
      %1515 = vrot.lane.b32.xlu0 %v1347, 112
      %v1516 = vpop.permute.xlu0 %1515
      %1517 = vrot.lane.b32.xlu0 %v1350, 112
      %v1518 = vpop.permute.xlu0 %1517
      %v1551 = vmul.f32 %v1389, %v1456
      %v1552 = vmul.f32 %v1389, %v1458
      %v1553 = vmul.f32 %v1389, %v1460
      %v1554 = vmul.f32 %v1389, %v1462
      %v1555 = vmul.f32 %v1389, %v1464
      %v1556 = vmul.f32 %v1389, %v1466
      %v1557 = vmul.f32 %v1389, %v1468
      %v1558 = vmul.f32 %v1389, %v1470
      %v1559 = vmul.f32 %v1389, %v1472
      %v1560 = vmul.f32 %v1389, %v1474
      %v1561 = vmul.f32 %v1389, %v1476
      %v1562 = vmul.f32 %v1389, %v1478
      %v1563 = vmul.f32 %v1389, %v1480
      %v1564 = vmul.f32 %v1389, %v1482
      %v1565 = vmul.f32 %v1389, %v1484
      %v1566 = vmul.f32 %v1389, %v1486
      %v1567 = vmul.f32 %v1389, %v1488
      %v1568 = vmul.f32 %v1389, %v1490
      %v1569 = vmul.f32 %v1389, %v1492
      %v1570 = vmul.f32 %v1389, %v1494
      %v1571 = vmul.f32 %v1389, %v1496
      %v1572 = vmul.f32 %v1389, %v1498
      %v1573 = vmul.f32 %v1389, %v1500
      %v1574 = vmul.f32 %v1389, %v1502
      %v1575 = vmul.f32 %v1389, %v1504
      %v1576 = vmul.f32 %v1389, %v1506
      %v1577 = vmul.f32 %v1389, %v1508
      %v1578 = vmul.f32 %v1389, %v1510
      %v1579 = vmul.f32 %v1389, %v1512
      %v1580 = vmul.f32 %v1389, %v1514
      %v1581 = vmul.f32 %v1389, %v1516
      %v1582 = vmul.f32 %v1389, %v1518
      %v1583 = vmul.f32 %v1391, 1.442695
      %v1584 = vpow.pop %v1583
      %v1585 = vmul.f32 %v1392, 1.442695
      %v1586 = vpow.pop %v1585
      %v1587 = vmul.f32 %v1393, 1.442695
      %v1588 = vpow.pop %v1587
      %v1589 = vmul.f32 %v1394, 1.442695
      %v1590 = vpow.pop %v1589
      %v1591 = vmul.f32 %v1395, 1.442695
      %v1592 = vpow.pop %v1591
      %v1593 = vmul.f32 %v1396, 1.442695
      %v1594 = vpow.pop %v1593
      %v1595 = vmul.f32 %v1397, 1.442695
      %v1596 = vpow.pop %v1595
      %v1597 = vmul.f32 %v1398, 1.442695
      %v1598 = vpow.pop %v1597
      %v1599 = vmul.f32 %v1399, 1.442695
      %v1600 = vpow.pop %v1599
      %v1601 = vmul.f32 %v1400, 1.442695
      %v1602 = vpow.pop %v1601
      %v1603 = vmul.f32 %v1401, 1.442695
      %v1604 = vpow.pop %v1603
      %v1605 = vmul.f32 %v1402, 1.442695
      %v1606 = vpow.pop %v1605
      %v1607 = vmul.f32 %v1403, 1.442695
      %v1608 = vpow.pop %v1607
      %v1609 = vmul.f32 %v1404, 1.442695
      %v1610 = vpow.pop %v1609
      %v1611 = vmul.f32 %v1405, 1.442695
      %v1612 = vpow.pop %v1611
      %v1613 = vmul.f32 %v1406, 1.442695
      %v1614 = vpow.pop %v1613
      %v1615 = vmul.f32 %v1407, 1.442695
      %v1616 = vpow.pop %v1615
      %v1617 = vmul.f32 %v1408, 1.442695
      %v1618 = vpow.pop %v1617
      %v1619 = vmul.f32 %v1409, 1.442695
      %v1620 = vpow.pop %v1619
      %v1621 = vmul.f32 %v1410, 1.442695
      %v1622 = vpow.pop %v1621
      %v1623 = vmul.f32 %v1411, 1.442695
      %v1624 = vpow.pop %v1623
      %v1625 = vmul.f32 %v1412, 1.442695
      %v1626 = vpow.pop %v1625
      %v1627 = vmul.f32 %v1413, 1.442695
      %v1628 = vpow.pop %v1627
      %v1629 = vmul.f32 %v1414, 1.442695
      %v1630 = vpow.pop %v1629
      %v1631 = vmul.f32 %v1415, 1.442695
      %v1632 = vpow.pop %v1631
      %v1633 = vmul.f32 %v1416, 1.442695
      %v1634 = vpow.pop %v1633
      %v1635 = vmul.f32 %v1417, 1.442695
      %v1636 = vpow.pop %v1635
      %v1637 = vmul.f32 %v1418, 1.442695
      %v1638 = vpow.pop %v1637
      %v1639 = vmul.f32 %v1419, 1.442695
      %v1640 = vpow.pop %v1639
      %v1641 = vmul.f32 %v1420, 1.442695
      %v1642 = vpow.pop %v1641
      %v1643 = vmul.f32 %v1421, 1.442695
      %v1644 = vpow.pop %v1643
      %v1645 = vmul.f32 %v1422, 1.442695
      %v1646 = vpow.pop %v1645
      %v1647 = vmul.f32 %v351, %v1584
      %v1648 = vmul.f32 %v352, %v1586
      %v1649 = vmul.f32 %v353, %v1588
      %v1650 = vmul.f32 %v354, %v1590
      %v1651 = vmul.f32 %v355, %v1592
      %v1652 = vmul.f32 %v356, %v1594
      %v1653 = vmul.f32 %v357, %v1596
      %v1654 = vmul.f32 %v358, %v1598
      %v1655 = vmul.f32 %v359, %v1600
      %v1656 = vmul.f32 %v360, %v1602
      %v1657 = vmul.f32 %v361, %v1604
      %v1658 = vmul.f32 %v362, %v1606
      %v1659 = vmul.f32 %v363, %v1608
      %v1660 = vmul.f32 %v364, %v1610
      %v1661 = vmul.f32 %v365, %v1612
      %v1662 = vmul.f32 %v366, %v1614
      %v1663 = vmul.f32 %v367, %v1616
      %v1664 = vmul.f32 %v368, %v1618
      %v1665 = vmul.f32 %v369, %v1620
      %v1666 = vmul.f32 %v370, %v1622
      %v1667 = vmul.f32 %v371, %v1624
      %v1668 = vmul.f32 %v372, %v1626
      %v1669 = vmul.f32 %v373, %v1628
      %v1670 = vmul.f32 %v374, %v1630
      %v1671 = vmul.f32 %v375, %v1632
      %v1672 = vmul.f32 %v376, %v1634
      %v1673 = vmul.f32 %v377, %v1636
      %v1674 = vmul.f32 %v378, %v1638
      %v1675 = vmul.f32 %v379, %v1640
      %v1676 = vmul.f32 %v380, %v1642
      %v1677 = vmul.f32 %v381, %v1644
      %v1678 = vmul.f32 %v382, %v1646
      %v1679 = vadd.f32 %v1647, %v1551
      %v1680 = vadd.f32 %v1648, %v1552
      %v1681 = vadd.f32 %v1649, %v1553
      %v1682 = vadd.f32 %v1650, %v1554
      %v1683 = vadd.f32 %v1651, %v1555
      %v1684 = vadd.f32 %v1652, %v1556
      %v1685 = vadd.f32 %v1653, %v1557
      %v1686 = vadd.f32 %v1654, %v1558
      %v1687 = vadd.f32 %v1655, %v1559
      %v1688 = vadd.f32 %v1656, %v1560
      %v1689 = vadd.f32 %v1657, %v1561
      %v1690 = vadd.f32 %v1658, %v1562
      %v1691 = vadd.f32 %v1659, %v1563
      %v1692 = vadd.f32 %v1660, %v1564
      %v1693 = vadd.f32 %v1661, %v1565
      %v1694 = vadd.f32 %v1662, %v1566
      %v1695 = vadd.f32 %v1663, %v1567
      %v1696 = vadd.f32 %v1664, %v1568
      %v1697 = vadd.f32 %v1665, %v1569
      %v1698 = vadd.f32 %v1666, %v1570
      %v1699 = vadd.f32 %v1667, %v1571
      %v1700 = vadd.f32 %v1668, %v1572
      %v1701 = vadd.f32 %v1669, %v1573
      %v1702 = vadd.f32 %v1670, %v1574
      %v1703 = vadd.f32 %v1671, %v1575
      %v1704 = vadd.f32 %v1672, %v1576
      %v1705 = vadd.f32 %v1673, %v1577
      %v1706 = vadd.f32 %v1674, %v1578
      %v1707 = vadd.f32 %v1675, %v1579
      %v1708 = vadd.f32 %v1676, %v1580
      %v1709 = vadd.f32 %v1677, %v1581
      %v1710 = vadd.f32 %v1678, %v1582
      %v1711 = vsel %vm454, %v1391, 0.0
      %1712 = vadd.xlane.f32.xlu0 %v1711
      %v1713 = vpop.xlane.xlu0 %1712
      %v1714 = vsel %vm454, %v1392, 0.0
      %1715 = vadd.xlane.f32.xlu0 %v1714
      %v1716 = vpop.xlane.xlu0 %1715
      %v1717 = vsel %vm454, %v1393, 0.0
      %1718 = vadd.xlane.f32.xlu0 %v1717
      %v1719 = vpop.xlane.xlu0 %1718
      %v1720 = vsel %vm454, %v1394, 0.0
      %1721 = vadd.xlane.f32.xlu0 %v1720
      %v1722 = vpop.xlane.xlu0 %1721
      %v1723 = vsel %vm454, %v1395, 0.0
      %1724 = vadd.xlane.f32.xlu0 %v1723
      %v1725 = vpop.xlane.xlu0 %1724
      %v1726 = vsel %vm454, %v1396, 0.0
      %1727 = vadd.xlane.f32.xlu0 %v1726
      %v1728 = vpop.xlane.xlu0 %1727
      %v1729 = vsel %vm454, %v1397, 0.0
      %1730 = vadd.xlane.f32.xlu0 %v1729
      %v1731 = vpop.xlane.xlu0 %1730
      %v1732 = vsel %vm454, %v1398, 0.0
      %1733 = vadd.xlane.f32.xlu0 %v1732
      %v1734 = vpop.xlane.xlu0 %1733
      %v1735 = vsel %vm454, %v1399, 0.0
      %1736 = vadd.xlane.f32.xlu0 %v1735
      %v1737 = vpop.xlane.xlu0 %1736
      %v1738 = vsel %vm454, %v1400, 0.0
      %1739 = vadd.xlane.f32.xlu0 %v1738
      %v1740 = vpop.xlane.xlu0 %1739
      %v1741 = vsel %vm454, %v1401, 0.0
      %1742 = vadd.xlane.f32.xlu0 %v1741
      %v1743 = vpop.xlane.xlu0 %1742
      %v1744 = vsel %vm454, %v1402, 0.0
      %1745 = vadd.xlane.f32.xlu0 %v1744
      %v1746 = vpop.xlane.xlu0 %1745
      %v1747 = vsel %vm454, %v1403, 0.0
      %1748 = vadd.xlane.f32.xlu0 %v1747
      %v1749 = vpop.xlane.xlu0 %1748
      %v1750 = vsel %vm454, %v1404, 0.0
      %1751 = vadd.xlane.f32.xlu0 %v1750
      %v1752 = vpop.xlane.xlu0 %1751
      %v1753 = vsel %vm454, %v1405, 0.0
      %1754 = vadd.xlane.f32.xlu0 %v1753
      %v1755 = vpop.xlane.xlu0 %1754
      %v1756 = vsel %vm454, %v1406, 0.0
      %1757 = vadd.xlane.f32.xlu0 %v1756
      %v1758 = vpop.xlane.xlu0 %1757
      %v1759 = vsel %vm454, %v1407, 0.0
      %1760 = vadd.xlane.f32.xlu0 %v1759
      %v1761 = vpop.xlane.xlu0 %1760
      %v1762 = vsel %vm454, %v1408, 0.0
      %1763 = vadd.xlane.f32.xlu0 %v1762
      %v1764 = vpop.xlane.xlu0 %1763
      %v1765 = vsel %vm454, %v1409, 0.0
      %1766 = vadd.xlane.f32.xlu0 %v1765
      %v1767 = vpop.xlane.xlu0 %1766
      %v1768 = vsel %vm454, %v1410, 0.0
      %1769 = vadd.xlane.f32.xlu0 %v1768
      %v1770 = vpop.xlane.xlu0 %1769
      %v1771 = vsel %vm454, %v1411, 0.0
      %1772 = vadd.xlane.f32.xlu0 %v1771
      %v1773 = vpop.xlane.xlu0 %1772
      %v1774 = vsel %vm454, %v1412, 0.0
      %1775 = vadd.xlane.f32.xlu0 %v1774
      %v1776 = vpop.xlane.xlu0 %1775
      %v1777 = vsel %vm454, %v1413, 0.0
      %1778 = vadd.xlane.f32.xlu0 %v1777
      %v1779 = vpop.xlane.xlu0 %1778
      %v1780 = vsel %vm454, %v1414, 0.0
      %1781 = vadd.xlane.f32.xlu0 %v1780
      %v1782 = vpop.xlane.xlu0 %1781
      %v1783 = vsel %vm454, %v1415, 0.0
      %1784 = vadd.xlane.f32.xlu0 %v1783
      %v1785 = vpop.xlane.xlu0 %1784
      %v1786 = vsel %vm454, %v1416, 0.0
      %1787 = vadd.xlane.f32.xlu0 %v1786
      %v1788 = vpop.xlane.xlu0 %1787
      %v1789 = vsel %vm454, %v1417, 0.0
      %1790 = vadd.xlane.f32.xlu0 %v1789
      %v1791 = vpop.xlane.xlu0 %1790
      %v1792 = vsel %vm454, %v1418, 0.0
      %1793 = vadd.xlane.f32.xlu0 %v1792
      %v1794 = vpop.xlane.xlu0 %1793
      %v1795 = vsel %vm454, %v1419, 0.0
      %1796 = vadd.xlane.f32.xlu0 %v1795
      %v1797 = vpop.xlane.xlu0 %1796
      %v1798 = vsel %vm454, %v1420, 0.0
      %1799 = vadd.xlane.f32.xlu0 %v1798
      %v1800 = vpop.xlane.xlu0 %1799
      %v1801 = vsel %vm454, %v1421, 0.0
      %1802 = vadd.xlane.f32.xlu0 %v1801
      %v1803 = vpop.xlane.xlu0 %1802
      %v1804 = vsel %vm454, %v1422, 0.0
      %1805 = vadd.xlane.f32.xlu0 %v1804
      %v1806 = vpop.xlane.xlu0 %1805
      %v1807 = vmul.f32 %v1389, %v1679
      %v1808 = vmul.f32 %v1389, %v1680
      %v1809 = vmul.f32 %v1389, %v1681
      %v1810 = vmul.f32 %v1389, %v1682
      %v1811 = vmul.f32 %v1389, %v1683
      %v1812 = vmul.f32 %v1389, %v1684
      %v1813 = vmul.f32 %v1389, %v1685
      %v1814 = vmul.f32 %v1389, %v1686
      %v1815 = vmul.f32 %v1389, %v1687
      %v1816 = vmul.f32 %v1389, %v1688
      %v1817 = vmul.f32 %v1389, %v1689
      %v1818 = vmul.f32 %v1389, %v1690
      %v1819 = vmul.f32 %v1389, %v1691
      %v1820 = vmul.f32 %v1389, %v1692
      %v1821 = vmul.f32 %v1389, %v1693
      %v1822 = vmul.f32 %v1389, %v1694
      %v1823 = vmul.f32 %v1389, %v1695
      %v1824 = vmul.f32 %v1389, %v1696
      %v1825 = vmul.f32 %v1389, %v1697
      %v1826 = vmul.f32 %v1389, %v1698
      %v1827 = vmul.f32 %v1389, %v1699
      %v1828 = vmul.f32 %v1389, %v1700
      %v1829 = vmul.f32 %v1389, %v1701
      %v1830 = vmul.f32 %v1389, %v1702
      %v1831 = vmul.f32 %v1389, %v1703
      %v1832 = vmul.f32 %v1389, %v1704
      %v1833 = vmul.f32 %v1389, %v1705
      %v1834 = vmul.f32 %v1389, %v1706
      %v1835 = vmul.f32 %v1389, %v1707
      %v1836 = vmul.f32 %v1389, %v1708
      %v1837 = vmul.f32 %v1389, %v1709
      %v1838 = vmul.f32 %v1389, %v1710
      %v1839 = vadd.f32 %v391, %v1807
      %v1840 = vadd.f32 %v392, %v1808
      %v1841 = vadd.f32 %v393, %v1809
      %v1842 = vadd.f32 %v394, %v1810
      %v1843 = vadd.f32 %v395, %v1811
      %v1844 = vadd.f32 %v396, %v1812
      %v1845 = vadd.f32 %v397, %v1813
      %v1846 = vadd.f32 %v398, %v1814
      %v1847 = vadd.f32 %v399, %v1815
      %v1848 = vadd.f32 %v400, %v1816
      %v1849 = vadd.f32 %v401, %v1817
      %v1850 = vadd.f32 %v402, %v1818
      %v1851 = vadd.f32 %v403, %v1819
      %v1852 = vadd.f32 %v404, %v1820
      %v1853 = vadd.f32 %v405, %v1821
      %v1854 = vadd.f32 %v406, %v1822
      %v1855 = vadd.f32 %v407, %v1823
      %v1856 = vadd.f32 %v408, %v1824
      %v1857 = vadd.f32 %v409, %v1825
      %v1858 = vadd.f32 %v410, %v1826
      %v1859 = vadd.f32 %v411, %v1827
      %v1860 = vadd.f32 %v412, %v1828
      %v1861 = vadd.f32 %v413, %v1829
      %v1862 = vadd.f32 %v414, %v1830
      %v1863 = vadd.f32 %v415, %v1831
      %v1864 = vadd.f32 %v416, %v1832
      %v1865 = vadd.f32 %v417, %v1833
      %v1866 = vadd.f32 %v418, %v1834
      %v1867 = vadd.f32 %v419, %v1835
      %v1868 = vadd.f32 %v420, %v1836
      %v1869 = vadd.f32 %v421, %v1837
      %v1870 = vadd.f32 %v422, %v1838
      %1871 = vst.msk [vmem:[%s342] sm:$0xff] %vm454, %v1839
      %1872 = vst.msk [vmem:[%s342 + $0x8] sm:$0xff] %vm454, %v1840
      %1873 = vst.msk [vmem:[%s342 + $0x10] sm:$0xff] %vm454, %v1841
      %1874 = vst.msk [vmem:[%s342 + $0x18] sm:$0xff] %vm454, %v1842
      %1875 = vst.msk [vmem:[%s342 + $0x20] sm:$0xff] %vm454, %v1843
      %1876 = vst.msk [vmem:[%s342 + $0x28] sm:$0xff] %vm454, %v1844
      %1877 = vst.msk [vmem:[%s342 + $0x30] sm:$0xff] %vm454, %v1845
      %1878 = vst.msk [vmem:[%s342 + $0x38] sm:$0xff] %vm454, %v1846
      %1879 = vst.msk [vmem:[%s342 + $0x40] sm:$0xff] %vm454, %v1847
      %1880 = vst.msk [vmem:[%s342 + $0x48] sm:$0xff] %vm454, %v1848
      %1881 = vst.msk [vmem:[%s342 + $0x50] sm:$0xff] %vm454, %v1849
      %1882 = vst.msk [vmem:[%s342 + $0x58] sm:$0xff] %vm454, %v1850
      %1883 = vst.msk [vmem:[%s342 + $0x60] sm:$0xff] %vm454, %v1851
      %1884 = vst.msk [vmem:[%s342 + $0x68] sm:$0xff] %vm454, %v1852
      %1885 = vst.msk [vmem:[%s342 + $0x70] sm:$0xff] %vm454, %v1853
      %1886 = vst.msk [vmem:[%s342 + $0x78] sm:$0xff] %vm454, %v1854
      %1887 = vst.msk [vmem:[%s342 + $0x80] sm:$0xff] %vm454, %v1855
      %1888 = vst.msk [vmem:[%s342 + $0x88] sm:$0xff] %vm454, %v1856
      %1889 = vst.msk [vmem:[%s342 + $0x90] sm:$0xff] %vm454, %v1857
      %1890 = vst.msk [vmem:[%s342 + $0x98] sm:$0xff] %vm454, %v1858
      %1891 = vst.msk [vmem:[%s342 + $0xa0] sm:$0xff] %vm454, %v1859
      %1892 = vst.msk [vmem:[%s342 + $0xa8] sm:$0xff] %vm454, %v1860
      %1893 = vst.msk [vmem:[%s342 + $0xb0] sm:$0xff] %vm454, %v1861
      %1894 = vst.msk [vmem:[%s342 + $0xb8] sm:$0xff] %vm454, %v1862
      %1895 = vst.msk [vmem:[%s342 + $0xc0] sm:$0xff] %vm454, %v1863
      %1896 = vst.msk [vmem:[%s342 + $0xc8] sm:$0xff] %vm454, %v1864
      %1897 = vst.msk [vmem:[%s342 + $0xd0] sm:$0xff] %vm454, %v1865
      %1898 = vst.msk [vmem:[%s342 + $0xd8] sm:$0xff] %vm454, %v1866
      %1899 = vst.msk [vmem:[%s342 + $0xe0] sm:$0xff] %vm454, %v1867
      %1900 = vst.msk [vmem:[%s342 + $0xe8] sm:$0xff] %vm454, %v1868
      %1901 = vst.msk [vmem:[%s342 + $0xf0] sm:$0xff] %vm454, %v1869
      %1902 = vst.msk [vmem:[%s342 + $0xf8] sm:$0xff] %vm454, %v1870
      %vm1903 = vcmask 7168
      %1904 = vst.msk [vmem:[%s348] sm:$0xff] %vm1903, %v1713
      %1905 = vst.msk [vmem:[%s348 + $0x8] sm:$0xff] %vm1903, %v1716
      %1906 = vst.msk [vmem:[%s348 + $0x10] sm:$0xff] %vm1903, %v1719
      %1907 = vst.msk [vmem:[%s348 + $0x18] sm:$0xff] %vm1903, %v1722
      %1908 = vst.msk [vmem:[%s348 + $0x20] sm:$0xff] %vm1903, %v1725
      %1909 = vst.msk [vmem:[%s348 + $0x28] sm:$0xff] %vm1903, %v1728
      %1910 = vst.msk [vmem:[%s348 + $0x30] sm:$0xff] %vm1903, %v1731
      %1911 = vst.msk [vmem:[%s348 + $0x38] sm:$0xff] %vm1903, %v1734
      %1912 = vst.msk [vmem:[%s348 + $0x40] sm:$0xff] %vm1903, %v1737
      %1913 = vst.msk [vmem:[%s348 + $0x48] sm:$0xff] %vm1903, %v1740
      %1914 = vst.msk [vmem:[%s348 + $0x50] sm:$0xff] %vm1903, %v1743
      %1915 = vst.msk [vmem:[%s348 + $0x58] sm:$0xff] %vm1903, %v1746
      %1916 = vst.msk [vmem:[%s348 + $0x60] sm:$0xff] %vm1903, %v1749
      %1917 = vst.msk [vmem:[%s348 + $0x68] sm:$0xff] %vm1903, %v1752
      %1918 = vst.msk [vmem:[%s348 + $0x70] sm:$0xff] %vm1903, %v1755
      %1919 = vst.msk [vmem:[%s348 + $0x78] sm:$0xff] %vm1903, %v1758
      %1920 = vst.msk [vmem:[%s348 + $0x80] sm:$0xff] %vm1903, %v1761
      %1921 = vst.msk [vmem:[%s348 + $0x88] sm:$0xff] %vm1903, %v1764
      %1922 = vst.msk [vmem:[%s348 + $0x90] sm:$0xff] %vm1903, %v1767
      %1923 = vst.msk [vmem:[%s348 + $0x98] sm:$0xff] %vm1903, %v1770
      %1924 = vst.msk [vmem:[%s348 + $0xa0] sm:$0xff] %vm1903, %v1773
      %1925 = vst.msk [vmem:[%s348 + $0xa8] sm:$0xff] %vm1903, %v1776
      %1926 = vst.msk [vmem:[%s348 + $0xb0] sm:$0xff] %vm1903, %v1779
      %1927 = vst.msk [vmem:[%s348 + $0xb8] sm:$0xff] %vm1903, %v1782
      %1928 = vst.msk [vmem:[%s348 + $0xc0] sm:$0xff] %vm1903, %v1785
      %1929 = vst.msk [vmem:[%s348 + $0xc8] sm:$0xff] %vm1903, %v1788
      %1930 = vst.msk [vmem:[%s348 + $0xd0] sm:$0xff] %vm1903, %v1791
      %1931 = vst.msk [vmem:[%s348 + $0xd8] sm:$0xff] %vm1903, %v1794
      %1932 = vst.msk [vmem:[%s348 + $0xe0] sm:$0xff] %vm1903, %v1797
      %1933 = vst.msk [vmem:[%s348 + $0xe8] sm:$0xff] %vm1903, %v1800
      %1934 = vst.msk [vmem:[%s348 + $0xf0] sm:$0xff] %vm1903, %v1803
      %1935 = vst.msk [vmem:[%s348 + $0xf8] sm:$0xff] %vm1903, %v1806
      %s1936 = smul.u32 32, %s21
      %p1937 = scmp.lt.s32.totalorder %s1936, 63
      %s1938 = scalar_select %p1937, %s1936, 63
      %s1939 = smul.addr %s1938, 8
      %s1940 = scalar_lea.vmem %s8, %s1939
      %s1941 = smul.u32 32, %s21
      %p1942 = scmp.lt.s32.totalorder %s1941, 63
      %s1943 = scalar_select %p1942, %s1941, 63
      %s1944 = smul.addr %s1943, 8
      %s1945 = scalar_lea.vmem %s9, %s1944
      // Predicated region
      $region53: #{affine_coupling_forward.1} parent=51 // pred_check
        %p1946 = pneg %p212
      $region54: #{affine_coupling_forward.1} parent=51 // pred_check_branch
        %1948 = sbr.rel (%p1946) target = $region56
      $region55: #{affine_coupling_forward.1} parent=51 // pred_region
        %s1949 = smul.u32 32, %s21
      $region56: #{affine_coupling_forward.1} parent=51 // pred_fallthru
        _
      // Predicated region
      $region57: #{affine_coupling_forward.1} parent=51 // pred_check
        %p1950 = pneg %p238
      $region58: #{affine_coupling_forward.1} parent=51 // pred_check_branch
        %1952 = sbr.rel (%p1950) target = $region60
      $region59: #{affine_coupling_forward.1} parent=51 // pred_region
        %s1953 = smul.u32 32, %s21
      $region60: #{affine_coupling_forward.1} parent=51 // pred_fallthru
        _
    $region52: #{affine_coupling_forward.1} parent=5 // pred_fallthru
      _
    %p1954 = scmp.le.s32.totalorder 2, %s16
    // Predicated region
    $region61: #{affine_coupling_forward.1} parent=5 // pred_check
      %p1955 = pneg %p1954
    $region62: #{affine_coupling_forward.1} parent=5 // pred_check_branch
      %1957 = sbr.rel (%p1955) target = $region64
    $region63: #{affine_coupling_forward.1} parent=5 // pred_region
      %s1958 = ssub.s32 %s16, 2
      // Predicated region
      $region65: #{affine_coupling_forward.1} parent=63 // pred_check
        %p1959 = pneg %p218
      $region66: #{affine_coupling_forward.1} parent=63 // pred_check_branch
        %1961 = sbr.rel (%p1959) target = $region68
      $region67: #{affine_coupling_forward.1} parent=63 // pred_region
        %s1962 = smul.u32 32, %s22
        %p1963 = scmp.lt.s32.totalorder %s1962, 63
        %s1964 = scalar_select %p1963, %s1962, 63
        %s1965 = smul.addr %s1964, 8
        %s1966 = scalar_lea.vmem %s8, %s1965
      $region68: #{affine_coupling_forward.1} parent=63 // pred_fallthru
        _
      // Predicated region
      $region69: #{affine_coupling_forward.1} parent=63 // pred_check
        %p1967 = pneg %p244
      $region70: #{affine_coupling_forward.1} parent=63 // pred_check_branch
        %1969 = sbr.rel (%p1967) target = $region72
      $region71: #{affine_coupling_forward.1} parent=63 // pred_region
        %s1970 = smul.u32 32, %s22
        %p1971 = scmp.lt.s32.totalorder %s1970, 63
        %s1972 = scalar_select %p1971, %s1970, 63
        %s1973 = smul.addr %s1972, 8
        %s1974 = scalar_lea.vmem %s9, %s1973
      $region72: #{affine_coupling_forward.1} parent=63 // pred_fallthru
        _
    $region64: #{affine_coupling_forward.1} parent=5 // pred_fallthru
      _
  $region6: #{affine_coupling_forward.1} parent=0 // loop_footer
    %s20 = sadd.s32 1, %s16
  $region7: #{affine_coupling_forward.1} parent=0 // loop_footer_branch
    %15 = sbr.rel target = $region3
  $region8: #{affine_coupling_forward.1} parent=0 // loop_exit
    _

</llo_original>
